<compile_context>
chip_gen: v6e
topology: v6e:2x2x1
jax: 0.10.0
libtpu: 0.0.40
codegen_flags: <defaults>
</compile_context>

<pallas_src>
import jax
import jax.numpy as jnp
import numpy as np
from jax.experimental import pallas as pl
from jax.experimental.pallas import tpu as pltpu

_FUSED_ORDER = ("wq1", "bq1", "wq2", "bq2",
                "wk1", "bk1", "wk2", "bk2",
                "wv", "bv", "wo", "bo")
_KV_ORDER = ("wk1", "bk1", "wk2", "bk2", "wv", "bv")
_Q_ORDER = ("wq1", "bq1", "wq2", "bq2", "wo", "bo")

_NEG = -1e30


# --------------------------------------------------------------------------- #
# In-kernel building blocks
# --------------------------------------------------------------------------- #
def _proj_px(t_bf16, w_ref, b_ref, out_dtype=jnp.bfloat16):
    """1x1-conv (BN folded) + ReLU with pixels on lanes: (out,in)@(in,P)+(out,1)."""
    y = jnp.dot(w_ref[...], t_bf16, preferred_element_type=jnp.float32)
    return jnp.maximum(y + b_ref[...], 0.0).astype(out_dtype)


def _proj_cls(t_bf16, w_ref, b_ref, out_dtype=jnp.bfloat16):
    """1x1-conv (BN folded) + ReLU on class rows: (K,in)@(in,out)+(1,out)."""
    y = jnp.dot(t_bf16, w_ref[...], preferred_element_type=jnp.float32)
    return jnp.maximum(y + b_ref[...], 0.0).astype(out_dtype)


def _class_assign(pT):
    """First-occurrence argmax over classes -> one-hot (K,P) f32, counts (K,1)."""
    K = pT.shape[0]
    mx_pix = jnp.max(pT, axis=0, keepdims=True)                       # (1, P)
    iota_k = jax.lax.broadcasted_iota(jnp.int32, pT.shape, 0)         # (K, P)
    idx = jnp.min(jnp.where(pT >= mx_pix, iota_k, K), axis=0, keepdims=True)
    onehot = (iota_k == idx).astype(jnp.float32)                      # (K, P)
    counts = jnp.sum(onehot, axis=1, keepdims=True)                   # (K, 1)
    return onehot, counts


def _attention(xT, counts, k_cls, v_cls, wq1, bq1, wq2, bq2, wo, bo, out_dtype):
    """Class-collapsed SelfAttentionBlock on a (C, P) pixel tile -> (C, P)."""
    q1 = _proj_px(xT, wq1, bq1)                                       # (T, P) bf16
    qT = _proj_px(q1, wq2, bq2)                                       # (T, P) bf16
    Tch = qT.shape[0]
    sim = jnp.dot(k_cls, qT, preferred_element_type=jnp.float32) * (float(Tch) ** -0.5)
    present = counts > 0.0                                            # (K, 1)
    m = jnp.max(jnp.where(present, sim, _NEG), axis=0, keepdims=True)
    p_att = counts * jnp.exp(sim - m)                                 # (K, P)
    denom = jnp.maximum(jnp.sum(p_att, axis=0, keepdims=True), 1e-30)
    p_att = p_att * pl.reciprocal(denom, approx=True)                 # normalize pre-cast
    ctx = jax.lax.dot_general(v_cls, p_att.astype(jnp.bfloat16),      # (T, P) f32
                              (((0,), (0,)), ((), ())),
                              preferred_element_type=jnp.float32)
    return _proj_px(ctx.astype(jnp.bfloat16), wo, bo, out_dtype)      # (C, P)


# --------------------------------------------------------------------------- #
# Kernels
# --------------------------------------------------------------------------- #
def _fused_kernel(x_ref, p_ref,
                  wq1, bq1, wq2, bq2, wk1, bk1, wk2, bk2, wv, bv, wo, bo,
                  out_ref):
    """Single-pass per-batch kernel (whole HW resident)."""
    xT = x_ref[0].astype(jnp.bfloat16)                                # f32 -> bf16 in VMEM
    pT = p_ref[0]                                                     # (K, HW) f32
    onehot, counts = _class_assign(pT)

    # per-class masked softmax pooling over pixels (class representations)
    masked = jnp.where(onehot > 0.0, pT, _NEG)
    mx_cls = jnp.max(masked, axis=1, keepdims=True)                   # (K, 1)
    mx_safe = jnp.where(mx_cls > -1e29, mx_cls, 0.0)                  # empty-class guard
    e = onehot * jnp.exp(jnp.minimum(pT - mx_safe, 0.0))              # (K, HW), <= 1
    denom = jnp.sum(e, axis=1, keepdims=True)
    class_num = jax.lax.dot_general(e.astype(jnp.bfloat16), xT,
                                    (((1,), (1,)), ((), ())),
                                    preferred_element_type=jnp.float32)
    cr = (class_num * pl.reciprocal(jnp.maximum(denom, 1e-30), approx=True)
          ).astype(jnp.bfloat16)                                      # (K, C)

    k_cls = _proj_cls(_proj_cls(cr, wk1, bk1), wk2, bk2)              # (K, T) bf16
    v_cls = _proj_cls(cr, wv, bv)                                     # (K, T) bf16

    out_ref[0] = _attention(xT, counts, k_cls, v_cls,
                            wq1, bq1, wq2, bq2, wo, bo, out_ref.dtype)


def _stats_kernel(x_ref, p_ref, wk1, bk1, wk2, bk2, wv, bv,
                  counts_ref, kcls_ref, vcls_ref,
                  m_sc, l_sc, cnt_sc, acc_sc):
    """Pass 1: flash-style online-softmax class pooling over HW tiles, then k/v."""
    t = pl.program_id(1)
    nT = pl.num_programs(1)

    @pl.when(t == 0)
    def _():
        m_sc[...] = jnp.full(m_sc.shape, _NEG, m_sc.dtype)
        l_sc[...] = jnp.zeros(l_sc.shape, l_sc.dtype)
        cnt_sc[...] = jnp.zeros(cnt_sc.shape, cnt_sc.dtype)
        acc_sc[...] = jnp.zeros(acc_sc.shape, acc_sc.dtype)

    xT = x_ref[0].astype(jnp.bfloat16)                                # (C, tHW)
    pT = p_ref[0]                                                     # (K, tHW) f32
    onehot, counts = _class_assign(pT)
    cnt_sc[...] += counts

    masked = jnp.where(onehot > 0.0, pT, _NEG)
    tile_max = jnp.max(masked, axis=1, keepdims=True)                 # (K, 1)
    m_old = m_sc[...]
    m_new = jnp.maximum(m_old, tile_max)
    m_safe = jnp.where(m_new > -1e29, m_new, 0.0)                     # empty-class guard
    alpha = jnp.exp(jnp.minimum(m_old - m_safe, 0.0))                 # underflows to 0 at init
    e = onehot * jnp.exp(jnp.minimum(pT - m_safe, 0.0))               # (K, tHW), <= 1
    l_sc[...] = alpha * l_sc[...] + jnp.sum(e, axis=1, keepdims=True)
    acc_sc[...] = alpha * acc_sc[...] + jax.lax.dot_general(
        e.astype(jnp.bfloat16), xT, (((1,), (1,)), ((), ())),
        preferred_element_type=jnp.float32)
    m_sc[...] = m_new

    @pl.when(t == nT - 1)
    def _():
        counts_ref[0] = cnt_sc[...]
        cr = (acc_sc[...] * pl.reciprocal(jnp.maximum(l_sc[...], 1e-30), approx=True)
              ).astype(jnp.bfloat16)                                  # (K, C)
        kcls_ref[0] = _proj_cls(_proj_cls(cr, wk1, bk1), wk2, bk2)    # (K, T) bf16
        vcls_ref[0] = _proj_cls(cr, wv, bv)                           # (K, T) bf16


def _pixel_kernel(x_ref, counts_ref, kcls_ref, vcls_ref,
                  wq1, bq1, wq2, bq2, wo, bo, out_ref):
    """Pass 2: pixel-tile path (q projections + class-collapsed attention + out)."""
    xT = x_ref[0].astype(jnp.bfloat16)                                # (C, tHW)
    out_ref[0] = _attention(xT, counts_ref[0], kcls_ref[0], vcls_ref[0],
                            wq1, bq1, wq2, bq2, wo, bo, out_ref.dtype)


# --------------------------------------------------------------------------- #
# Wrapper helpers
# --------------------------------------------------------------------------- #
def _prep_params(params):
    """Fold BN(eval) scale into conv weights, cast to bf16, orient for the
    channels-on-sublane / pixels-on-lane kernel layout."""
    bf16, f32 = jnp.bfloat16, jnp.float32
    w = {}
    w["wq1"] = (params["wq1"] * params["sq1"]).T.astype(bf16)   # (T, C)
    w["bq1"] = params["bq1"].T.astype(f32)                      # (T, 1)
    w["wq2"] = (params["wq2"] * params["sq2"]).T.astype(bf16)   # (T, T)
    w["bq2"] = params["bq2"].T.astype(f32)                      # (T, 1)
    w["wk1"] = (params["wk1"] * params["sk1"]).astype(bf16)     # (C, T)
    w["bk1"] = params["bk1"].astype(f32)                        # (1, T)
    w["wk2"] = (params["wk2"] * params["sk2"]).astype(bf16)     # (T, T)
    w["bk2"] = params["bk2"].astype(f32)                        # (1, T)
    w["wv"] = (params["wv"] * params["sv"]).astype(bf16)        # (C, T)
    w["bv"] = params["bv"].astype(f32)                          # (1, T)
    w["wo"] = (params["wo"] * params["so"]).T.astype(bf16)      # (C, T)
    w["bo"] = params["bo"].T.astype(f32)                        # (C, 1)
    return w


def _full_spec(a):
    nd = a.ndim
    return pl.BlockSpec(a.shape, lambda *_, nd=nd: (0,) * nd)


def _physical_vmem_bytes():
    try:
        return int(pltpu.get_tpu_info().vmem_capacity_bytes)
    except Exception:
        return 64 << 20            # conservative (v7x per-TC VMEM)


def _pick_hw_tile(hw, target=2048):
    """Largest multiple of 128 that divides hw and is <= target; else hw."""
    if hw <= target or hw % 128 != 0:
        return hw
    for t in range(target - target % 128, 127, -128):
        if hw % t == 0:
            return t
    return hw


def _bytes(*arrs):
    return sum(int(a.size) * a.dtype.itemsize for a in arrs)


def _fused_budget(C, K, HW, T, x_item, w_bytes):
    blocks = 2 * HW * (C * x_item + K * 4 + C * 2)            # x, preds, out(bf16) x2 bufs
    interm = HW * (C * 2 + 6 * K * 4 + 3 * T * 4) + 4 * K * max(C, T) * 4
    return blocks + 2 * w_bytes + interm + (4 << 20)


def _stats_budget(C, K, tHW, T, x_item, w_bytes):
    blocks = 2 * tHW * (C * x_item + K * 4) + 2 * (K * 4 + 2 * K * T * 2)
    scratch = K * (C + 3) * 4
    interm = tHW * (C * 2 + 6 * K * 4) + 4 * K * max(C, T) * 4
    return blocks + 2 * w_bytes + scratch + interm + (2 << 20)


def _pixel_budget(C, K, tHW, T, x_item, w_bytes):
    blocks = 2 * tHW * (C * x_item + C * 2) + 2 * (K * 4 + 2 * K * T * 2)
    interm = tHW * (C * 2 + 2 * T * 2 + 3 * K * 4 + T * 4 + C * 4)
    return blocks + 2 * w_bytes + interm + (2 << 20)


# --------------------------------------------------------------------------- #
# Public entry point
# --------------------------------------------------------------------------- #
def semantic_level_context(x, preds, feats_il, params, *,
                           out_dtype=jnp.bfloat16, force_two_pass=None):
    """x: (B,C,H,W) f32, preds: (B,K,H,W). feats_il unused (concat_input=False).
    Returns (B,C,H,W) in `out_dtype` (bf16 default to halve HBM writeback;
    pass jnp.float32 for the module's exact output dtype)."""
    del feats_il
    B, C, H, W_ = x.shape
    K = preds.shape[1]
    HW = H * W_
    T = params["wq1"].shape[1]

    # NCHW is already the layout the kernels want; no wrapper dtype convert of x
    # (the kernels cast the f32 tile to bf16 inside VMEM).
    x_t = x.reshape(B, C, HW)
    p_t = preds.reshape(B, K, HW).astype(jnp.float32)   # preds stay f32 (argmax/softmax)
    x_item = x_t.dtype.itemsize

    w = _prep_params(params)
    w_all = [w[n] for n in _FUSED_ORDER]
    w_kv = [w[n] for n in _KV_ORDER]
    w_q = [w[n] for n in _Q_ORDER]

    phys = _physical_vmem_bytes()
    phys_limit = max(phys - (8 << 20), 16 << 20)
    fused_need = _fused_budget(C, K, HW, T, x_item, _bytes(*w_all))

    if force_two_pass is not None:
        two_pass = bool(force_two_pass)
    else:
        # Two-pass HW-tiled path when (a) batch can't feed both v7x TensorCores,
        # (b) VMEM is v7x-sized, or (c) the fused whole-batch block doesn't fit.
        two_pass = (B < 2) or (phys <= (80 << 20)) or (fused_need > phys_limit)

    if not two_pass:
        vmem_limit = int(min(phys_limit, max(fused_need, 32 << 20)))
        out_flat = pl.pallas_call(
            _fused_kernel,
            out_shape=jax.ShapeDtypeStruct((B, C, HW), out_dtype),
            grid_spec=pltpu.PrefetchScalarGridSpec(
                num_scalar_prefetch=0,
                grid=(B,),
                in_specs=[pl.BlockSpec((1, C, HW), lambda b: (b, 0, 0)),
                          pl.BlockSpec((1, K, HW), lambda b: (b, 0, 0))]
                         + [_full_spec(a) for a in w_all],
                out_specs=pl.BlockSpec((1, C, HW), lambda b: (b, 0, 0))),
            compiler_params=pltpu.CompilerParams(
                dimension_semantics=("parallel",),
                vmem_limit_bytes=vmem_limit),
        )(x_t, p_t, *w_all)
        return out_flat.reshape(B, C, H, W_)

    # ------------------- two-pass HW-tiled path ------------------- #
    tHW = _pick_hw_tile(HW)
    nT = HW // tHW

    # Pass 1: class stats (counts, k_cls, v_cls) — reduction over HW tiles.
    p1_limit = int(min(phys_limit,
                       max(_stats_budget(C, K, tHW, T, x_item, _bytes(*w_kv)), 32 << 20)))
    counts, k_cls, v_cls = pl.pallas_call(
        _stats_kernel,
        out_shape=(jax.ShapeDtypeStruct((B, K, 1), jnp.float32),
                   jax.ShapeDtypeStruct((B, K, T), jnp.bfloat16),
                   jax.ShapeDtypeStruct((B, K, T), jnp.bfloat16)),
        grid_spec=pltpu.PrefetchScalarGridSpec(
            num_scalar_prefetch=0,
            grid=(B, nT),
            in_specs=[pl.BlockSpec((1, C, tHW), lambda b, t: (b, 0, t)),
                      pl.BlockSpec((1, K, tHW), lambda b, t: (b, 0, t))]
                     + [_full_spec(a) for a in w_kv],
            out_specs=(pl.BlockSpec((1, K, 1), lambda b, t: (b, 0, 0)),
                       pl.BlockSpec((1, K, T), lambda b, t: (b, 0, 0)),
                       pl.BlockSpec((1, K, T), lambda b, t: (b, 0, 0))),
            scratch_shapes=[pltpu.VMEM((K, 1), jnp.float32),   # running max
                            pltpu.VMEM((K, 1), jnp.float32),   # running denom
                            pltpu.VMEM((K, 1), jnp.float32),   # pixel counts
                            pltpu.VMEM((K, C), jnp.float32)]), # weighted-sum acc
        compiler_params=pltpu.CompilerParams(
            dimension_semantics=("parallel", "arbitrary"),
            vmem_limit_bytes=p1_limit),
    )(x_t, p_t, *w_kv)

    # Pass 2: pixel path — fully parallel (B, HW/tHW) grid (feeds both v7x TCs).
    p2_limit = int(min(phys_limit,
                       max(_pixel_budget(C, K, tHW, T, x_item, _bytes(*w_q)), 32 << 20)))
    out_flat = pl.pallas_call(
        _pixel_kernel,
        out_shape=jax.ShapeDtypeStruct((B, C, HW), out_dtype),
        grid_spec=pltpu.PrefetchScalarGridSpec(
            num_scalar_prefetch=0,
            grid=(B, nT),
            in_specs=[pl.BlockSpec((1, C, tHW), lambda b, t: (b, 0, t)),
                      pl.BlockSpec((1, K, 1), lambda b, t: (b, 0, 0)),
                      pl.BlockSpec((1, K, T), lambda b, t: (b, 0, 0)),
                      pl.BlockSpec((1, K, T), lambda b, t: (b, 0, 0))]
                     + [_full_spec(a) for a in w_q],
            out_specs=pl.BlockSpec((1, C, tHW), lambda b, t: (b, 0, t))),
        compiler_params=pltpu.CompilerParams(
            dimension_semantics=("parallel", "parallel"),
            vmem_limit_bytes=p2_limit),
    )(x_t, counts, k_cls, v_cls, *w_q)
    return out_flat.reshape(B, C, H, W_)


# --------------------------------------------------------------------------- #
# Pure-JAX f32 reference (explicit feats_sl + full HW-key attention)
# --------------------------------------------------------------------------- #
def reference(x, preds, params):
    B, C, H, W_ = x.shape
    K = preds.shape[1]
    HW = H * W_
    Tch = params["wq1"].shape[1]
    xf = jnp.transpose(x.reshape(B, C, HW), (0, 2, 1)).astype(jnp.float32)   # (B,HW,C)
    pf = jnp.transpose(preds.reshape(B, K, HW), (0, 2, 1)).astype(jnp.float32)

    def proj(t, w, s, b):
        return jnp.maximum((t @ w) * s + b, 0.0)

    def one(xb, pb):
        mx = jnp.max(pb, axis=1, keepdims=True)
        iota_k = jax.lax.broadcasted_iota(jnp.int32, pb.shape, 1)
        idx = jnp.min(jnp.where(pb >= mx, iota_k, K), axis=1, keepdims=True)
        onehot = (iota_k == idx).astype(jnp.float32)                   # (HW, K)
        masked = jnp.where(onehot > 0, pb, -1e30)
        mx_c = jnp.max(masked, axis=0, keepdims=True)
        mx_safe = jnp.where(mx_c > -1e29, mx_c, 0.0)
        e = jnp.where(onehot > 0, jnp.exp(pb - mx_safe), 0.0)
        w_pool = e / jnp.maximum(jnp.sum(e, axis=0, keepdims=True), 1e-30)
        class_repr = w_pool.T @ xb                                      # (K, C)
        fsl = onehot @ class_repr                                       # (HW, C)
        q = proj(proj(xb, params["wq1"], params["sq1"], params["bq1"]),
                 params["wq2"], params["sq2"], params["bq2"])
        k = proj(proj(fsl, params["wk1"], params["sk1"], params["bk1"]),
                 params["wk2"], params["sk2"], params["bk2"])
        v = proj(fsl, params["wv"], params["sv"], params["bv"])
        sim = (q @ k.T) * (float(Tch) ** -0.5)
        sim = sim - jnp.max(sim, axis=-1, keepdims=True)
        p = jnp.exp(sim)
        attn = p / jnp.sum(p, axis=-1, keepdims=True)
        ctx = attn @ v
        return proj(ctx, params["wo"], params["so"], params["bo"])

    out = jax.vmap(one)(xf, pf)                                         # (B, HW, C)
    return jnp.transpose(out, (0, 2, 1)).reshape(B, C, H, W_)


def init_params(key, feats_channels, transform_channels):
    """Deterministic synthetic parameters. Conv weights stored as (in, out);
    BN(eval) represented as per-channel (scale, bias) of shape (1, out)."""
    C, T = feats_channels, transform_channels
    keys = jax.random.split(key, 12)

    def w(k, shp):
        return (0.1 * jax.random.normal(k, shp)).astype(jnp.float32)

    def affine(k, n):
        k1, k2 = jax.random.split(k)
        scale = (1.0 + 0.1 * jax.random.normal(k1, (1, n))).astype(jnp.float32)
        bias = (0.1 * jax.random.normal(k2, (1, n))).astype(jnp.float32)
        return scale, bias

    p = {}
    p["wq1"] = w(keys[0], (C, T)); p["sq1"], p["bq1"] = affine(keys[1], T)
    p["wq2"] = w(keys[2], (T, T)); p["sq2"], p["bq2"] = affine(keys[3], T)
    p["wk1"] = w(keys[4], (C, T)); p["sk1"], p["bk1"] = affine(keys[5], T)
    p["wk2"] = w(keys[6], (T, T)); p["sk2"], p["bk2"] = affine(keys[7], T)
    p["wv"] = w(keys[8], (C, T)); p["sv"], p["bv"] = affine(keys[9], T)
    p["wo"] = w(keys[10], (T, C)); p["so"], p["bo"] = affine(keys[11], C)
    return p


if __name__ == "__main__":
    B, C, K, H, W_, T = 2, 32, 8, 16, 16, 16   # feats_channels=32, transform_channels=16
    key = jax.random.PRNGKey(0)
    kx, kp, kf, kw = jax.random.split(key, 4)
    x = jax.random.normal(kx, (B, C, H, W_), dtype=jnp.float32)
    preds = jax.random.normal(kp, (B, K, H, W_), dtype=jnp.float32)
    feats_il = jax.random.normal(kf, (B, C, H, W_), dtype=jnp.float32)
    params = init_params(kw, C, T)

    ref = reference(x, preds, params)

    # Exercise both execution paths (fused single-pass and two-pass HW-tiled)
    # regardless of which TPU generation the sandbox runs on.
    for two_pass in (False, True):
        out = semantic_level_context(x, preds, feats_il, params,
                                     force_two_pass=two_pass)
        jax.block_until_ready(out)
        assert out.shape == (B, C, H, W_)
        # Tolerance accommodates bf16 MXU operands, bf16 output store and
        # approx-reciprocal softmax normalization vs. the full-f32 reference.
        np.testing.assert_allclose(np.asarray(out.astype(jnp.float32)),
                                   np.asarray(ref), rtol=3e-2, atol=2e-2)

    print("KERNEL_OK")
</pallas_src>

<mosaic_0001>
module attributes {stable_mosaic.version = 11 : i64} {
  func.func @_fused_kernel(%arg0: i32, %arg1: memref<1x32x256xf32, #tpu.memory_space<vmem>>, %arg2: memref<1x8x256xf32, #tpu.memory_space<vmem>>, %arg3: memref<16x32xbf16, #tpu.memory_space<vmem>>, %arg4: memref<16x1xf32, #tpu.memory_space<vmem>>, %arg5: memref<16x16xbf16, #tpu.memory_space<vmem>>, %arg6: memref<16x1xf32, #tpu.memory_space<vmem>>, %arg7: memref<32x16xbf16, #tpu.memory_space<vmem>>, %arg8: memref<1x16xf32, #tpu.memory_space<vmem>>, %arg9: memref<16x16xbf16, #tpu.memory_space<vmem>>, %arg10: memref<1x16xf32, #tpu.memory_space<vmem>>, %arg11: memref<32x16xbf16, #tpu.memory_space<vmem>>, %arg12: memref<1x16xf32, #tpu.memory_space<vmem>>, %arg13: memref<32x16xbf16, #tpu.memory_space<vmem>>, %arg14: memref<32x1xf32, #tpu.memory_space<vmem>>, %arg15: memref<1x32x256xbf16, #tpu.memory_space<vmem>>) attributes {dimension_semantics = [#tpu.dimension_semantics<parallel>], iteration_bounds = array<i64: 2>, scalar_prefetch = 0 : i64, scratch_operands = 0 : i64, tpu.core_type = #tpu.core_type<tc>, window_params = [{transform_indices = @transform_0, window_bounds = array<i64: 1, 32, 256>}, {transform_indices = @transform_1, window_bounds = array<i64: 1, 8, 256>}, {pipeline_mode = #tpu.pipeline_mode<synchronous>, transform_indices = @transform_2, window_bounds = array<i64: 16, 32>}, {pipeline_mode = #tpu.pipeline_mode<synchronous>, transform_indices = @transform_3, window_bounds = array<i64: 16, 1>}, {pipeline_mode = #tpu.pipeline_mode<synchronous>, transform_indices = @transform_4, window_bounds = array<i64: 16, 16>}, {pipeline_mode = #tpu.pipeline_mode<synchronous>, transform_indices = @transform_5, window_bounds = array<i64: 16, 1>}, {pipeline_mode = #tpu.pipeline_mode<synchronous>, transform_indices = @transform_6, window_bounds = array<i64: 32, 16>}, {pipeline_mode = #tpu.pipeline_mode<synchronous>, transform_indices = @transform_7, window_bounds = array<i64: 1, 16>}, {pipeline_mode = #tpu.pipeline_mode<synchronous>, transform_indices = @transform_8, window_bounds = array<i64: 16, 16>}, {pipeline_mode = #tpu.pipeline_mode<synchronous>, transform_indices = @transform_9, window_bounds = array<i64: 1, 16>}, {pipeline_mode = #tpu.pipeline_mode<synchronous>, transform_indices = @transform_10, window_bounds = array<i64: 32, 16>}, {pipeline_mode = #tpu.pipeline_mode<synchronous>, transform_indices = @transform_11, window_bounds = array<i64: 1, 16>}, {pipeline_mode = #tpu.pipeline_mode<synchronous>, transform_indices = @transform_12, window_bounds = array<i64: 32, 16>}, {pipeline_mode = #tpu.pipeline_mode<synchronous>, transform_indices = @transform_13, window_bounds = array<i64: 32, 1>}, {transform_indices = @transform_14, window_bounds = array<i64: 1, 32, 256>}]} {
    %c0 = arith.constant 0 : index
    %c0_0 = arith.constant 0 : index
    %c0_1 = arith.constant 0 : index
    %0 = vector.load %arg1[%c0, %c0_0, %c0_1] : memref<1x32x256xf32, #tpu.memory_space<vmem>>, vector<1x32x256xf32>
    %1 = vector.shape_cast %0 : vector<1x32x256xf32> to vector<32x256xf32>
    %2 = arith.truncf %1 : vector<32x256xf32> to vector<32x256xbf16>
    %c0_2 = arith.constant 0 : index
    %c0_3 = arith.constant 0 : index
    %c0_4 = arith.constant 0 : index
    %3 = vector.load %arg2[%c0_2, %c0_3, %c0_4] : memref<1x8x256xf32, #tpu.memory_space<vmem>>, vector<1x8x256xf32>
    %4 = vector.shape_cast %3 : vector<1x8x256xf32> to vector<8x256xf32>
    %cst = arith.constant dense<0xFF800000> : vector<256xf32>
    %5 = vector.multi_reduction <maximumf>, %4, %cst [0] : vector<8x256xf32> to vector<256xf32>
    %6 = vector.shape_cast %5 : vector<256xf32> to vector<1x256xf32>
    %7 = tpu.iota {dimensions = array<i32: 0>} : vector<8x256xi32>
    %8 = vector.broadcast %6 : vector<1x256xf32> to vector<8x256xf32>
    %9 = arith.cmpf oge, %4, %8 : vector<8x256xf32>
    %c8_i32 = arith.constant 8 : i32
    %10 = vector.broadcast %c8_i32 : i32 to vector<8x256xi32>
    %11 = arith.select %9, %7, %10 : vector<8x256xi1>, vector<8x256xi32>
    %cst_5 = arith.constant dense<2147483647> : vector<256xi32>
    %12 = vector.multi_reduction <minsi>, %11, %cst_5 [0] : vector<8x256xi32> to vector<256xi32>
    %13 = vector.shape_cast %12 : vector<256xi32> to vector<1x256xi32>
    %14 = vector.broadcast %13 : vector<1x256xi32> to vector<8x256xi32>
    %15 = arith.cmpi eq, %7, %14 : vector<8x256xi32>
    %16 = arith.extui %15 : vector<8x256xi1> to vector<8x256xi32>
    %17 = arith.sitofp %16 : vector<8x256xi32> to vector<8x256xf32>
    %cst_6 = arith.constant dense<0.000000e+00> : vector<8xf32>
    %18 = vector.multi_reduction <add>, %17, %cst_6 [1] : vector<8x256xf32> to vector<8xf32>
    %19 = vector.shape_cast %18 : vector<8xf32> to vector<8x1xf32>
    %cst_7 = arith.constant 0.000000e+00 : f32
    %20 = vector.broadcast %cst_7 : f32 to vector<8x256xf32>
    %21 = arith.cmpf ogt, %17, %20 : vector<8x256xf32>
    %cst_8 = arith.constant -1.000000e+30 : f32
    %22 = vector.broadcast %cst_8 : f32 to vector<8x256xf32>
    %23 = arith.select %21, %4, %22 : vector<8x256xi1>, vector<8x256xf32>
    %cst_9 = arith.constant dense<0xFF800000> : vector<8xf32>
    %24 = vector.multi_reduction <maximumf>, %23, %cst_9 [1] : vector<8x256xf32> to vector<8xf32>
    %25 = vector.shape_cast %24 : vector<8xf32> to vector<8x1xf32>
    %cst_10 = arith.constant -1.000000e+29 : f32
    %26 = vector.broadcast %cst_10 : f32 to vector<8x1xf32>
    %27 = arith.cmpf ogt, %25, %26 : vector<8x1xf32>
    %cst_11 = arith.constant 0.000000e+00 : f32
    %28 = vector.broadcast %cst_11 : f32 to vector<8x1xf32>
    %29 = arith.select %27, %25, %28 : vector<8x1xi1>, vector<8x1xf32>
    %30 = vector.broadcast %29 : vector<8x1xf32> to vector<8x256xf32>
    %31 = arith.subf %4, %30 : vector<8x256xf32>
    %cst_12 = arith.constant 0.000000e+00 : f32
    %32 = vector.broadcast %cst_12 : f32 to vector<8x256xf32>
    %33 = arith.minimumf %31, %32 : vector<8x256xf32>
    %34 = math.exp %33 : vector<8x256xf32>
    %35 = arith.mulf %17, %34 : vector<8x256xf32>
    %cst_13 = arith.constant dense<0.000000e+00> : vector<8xf32>
    %36 = vector.multi_reduction <add>, %35, %cst_13 [1] : vector<8x256xf32> to vector<8xf32>
    %37 = vector.shape_cast %36 : vector<8xf32> to vector<8x1xf32>
    %38 = arith.truncf %35 : vector<8x256xf32> to vector<8x256xbf16>
    %cst_14 = arith.constant dense<0.000000e+00> : vector<8x32xf32>
    %39 = tpu.matmul %38, %2, %cst_14 {dimension_numbers = #tpu.dot_dimension_numbers<[1], [1], [0], [0], [0, 0, 1, 0], [], []>} : vector<8x256xbf16>, vector<32x256xbf16>, vector<8x32xf32> -> vector<8x32xf32>
    %cst_15 = arith.constant 1.000000e-30 : f32
    %40 = vector.broadcast %cst_15 : f32 to vector<8x1xf32>
    %41 = arith.maximumf %37, %40 : vector<8x1xf32>
    %42 = tpu.reciprocal %41 {approx = true} : vector<8x1xf32> -> vector<8x1xf32>
    %43 = vector.broadcast %42 : vector<8x1xf32> to vector<8x32xf32>
    %44 = arith.mulf %39, %43 : vector<8x32xf32>
    %45 = arith.truncf %44 : vector<8x32xf32> to vector<8x32xbf16>
    %c0_16 = arith.constant 0 : index
    %c0_17 = arith.constant 0 : index
    %46 = vector.load %arg7[%c0_16, %c0_17] : memref<32x16xbf16, #tpu.memory_space<vmem>>, vector<32x16xbf16>
    %cst_18 = arith.constant dense<0.000000e+00> : vector<8x16xf32>
    %47 = tpu.matmul %45, %46, %cst_18 {dimension_numbers = #tpu.dot_dimension_numbers<[1], [0], [0], [1], [0, 0, 1, 1], [], []>} : vector<8x32xbf16>, vector<32x16xbf16>, vector<8x16xf32> -> vector<8x16xf32>
    %c0_19 = arith.constant 0 : index
    %c0_20 = arith.constant 0 : index
    %48 = vector.load %arg8[%c0_19, %c0_20] : memref<1x16xf32, #tpu.memory_space<vmem>>, vector<1x16xf32>
    %49 = vector.broadcast %48 : vector<1x16xf32> to vector<8x16xf32>
    %50 = arith.addf %47, %49 : vector<8x16xf32>
    %cst_21 = arith.constant 0.000000e+00 : f32
    %51 = vector.broadcast %cst_21 : f32 to vector<8x16xf32>
    %52 = arith.maximumf %50, %51 : vector<8x16xf32>
    %53 = arith.truncf %52 : vector<8x16xf32> to vector<8x16xbf16>
    %c0_22 = arith.constant 0 : index
    %c0_23 = arith.constant 0 : index
    %54 = vector.load %arg9[%c0_22, %c0_23] : memref<16x16xbf16, #tpu.memory_space<vmem>>, vector<16x16xbf16>
    %cst_24 = arith.constant dense<0.000000e+00> : vector<8x16xf32>
    %55 = tpu.matmul %53, %54, %cst_24 {dimension_numbers = #tpu.dot_dimension_numbers<[1], [0], [0], [1], [0, 0, 1, 1], [], []>} : vector<8x16xbf16>, vector<16x16xbf16>, vector<8x16xf32> -> vector<8x16xf32>
    %c0_25 = arith.constant 0 : index
    %c0_26 = arith.constant 0 : index
    %56 = vector.load %arg10[%c0_25, %c0_26] : memref<1x16xf32, #tpu.memory_space<vmem>>, vector<1x16xf32>
    %57 = vector.broadcast %56 : vector<1x16xf32> to vector<8x16xf32>
    %58 = arith.addf %55, %57 : vector<8x16xf32>
    %cst_27 = arith.constant 0.000000e+00 : f32
    %59 = vector.broadcast %cst_27 : f32 to vector<8x16xf32>
    %60 = arith.maximumf %58, %59 : vector<8x16xf32>
    %61 = arith.truncf %60 : vector<8x16xf32> to vector<8x16xbf16>
    %c0_28 = arith.constant 0 : index
    %c0_29 = arith.constant 0 : index
    %62 = vector.load %arg11[%c0_28, %c0_29] : memref<32x16xbf16, #tpu.memory_space<vmem>>, vector<32x16xbf16>
    %cst_30 = arith.constant dense<0.000000e+00> : vector<8x16xf32>
    %63 = tpu.matmul %45, %62, %cst_30 {dimension_numbers = #tpu.dot_dimension_numbers<[1], [0], [0], [1], [0, 0, 1, 1], [], []>} : vector<8x32xbf16>, vector<32x16xbf16>, vector<8x16xf32> -> vector<8x16xf32>
    %c0_31 = arith.constant 0 : index
    %c0_32 = arith.constant 0 : index
    %64 = vector.load %arg12[%c0_31, %c0_32] : memref<1x16xf32, #tpu.memory_space<vmem>>, vector<1x16xf32>
    %65 = vector.broadcast %64 : vector<1x16xf32> to vector<8x16xf32>
    %66 = arith.addf %63, %65 : vector<8x16xf32>
    %cst_33 = arith.constant 0.000000e+00 : f32
    %67 = vector.broadcast %cst_33 : f32 to vector<8x16xf32>
    %68 = arith.maximumf %66, %67 : vector<8x16xf32>
    %69 = arith.truncf %68 : vector<8x16xf32> to vector<8x16xbf16>
    %c0_34 = arith.constant 0 : index
    %c0_35 = arith.constant 0 : index
    %70 = vector.load %arg3[%c0_34, %c0_35] : memref<16x32xbf16, #tpu.memory_space<vmem>>, vector<16x32xbf16>
    %cst_36 = arith.constant dense<0.000000e+00> : vector<16x256xf32>
    %71 = tpu.matmul %70, %2, %cst_36 {dimension_numbers = #tpu.dot_dimension_numbers<[1], [0], [0], [1], [0, 0, 1, 1], [], []>} : vector<16x32xbf16>, vector<32x256xbf16>, vector<16x256xf32> -> vector<16x256xf32>
    %c0_37 = arith.constant 0 : index
    %c0_38 = arith.constant 0 : index
    %72 = vector.load %arg4[%c0_37, %c0_38] : memref<16x1xf32, #tpu.memory_space<vmem>>, vector<16x1xf32>
    %73 = vector.broadcast %72 : vector<16x1xf32> to vector<16x256xf32>
    %74 = arith.addf %71, %73 : vector<16x256xf32>
    %cst_39 = arith.constant 0.000000e+00 : f32
    %75 = vector.broadcast %cst_39 : f32 to vector<16x256xf32>
    %76 = arith.maximumf %74, %75 : vector<16x256xf32>
    %77 = arith.truncf %76 : vector<16x256xf32> to vector<16x256xbf16>
    %c0_40 = arith.constant 0 : index
    %c0_41 = arith.constant 0 : index
    %78 = vector.load %arg5[%c0_40, %c0_41] : memref<16x16xbf16, #tpu.memory_space<vmem>>, vector<16x16xbf16>
    %cst_42 = arith.constant dense<0.000000e+00> : vector<16x256xf32>
    %79 = tpu.matmul %78, %77, %cst_42 {dimension_numbers = #tpu.dot_dimension_numbers<[1], [0], [0], [1], [0, 0, 1, 1], [], []>} : vector<16x16xbf16>, vector<16x256xbf16>, vector<16x256xf32> -> vector<16x256xf32>
    %c0_43 = arith.constant 0 : index
    %c0_44 = arith.constant 0 : index
    %80 = vector.load %arg6[%c0_43, %c0_44] : memref<16x1xf32, #tpu.memory_space<vmem>>, vector<16x1xf32>
    %81 = vector.broadcast %80 : vector<16x1xf32> to vector<16x256xf32>
    %82 = arith.addf %79, %81 : vector<16x256xf32>
    %cst_45 = arith.constant 0.000000e+00 : f32
    %83 = vector.broadcast %cst_45 : f32 to vector<16x256xf32>
    %84 = arith.maximumf %82, %83 : vector<16x256xf32>
    %85 = arith.truncf %84 : vector<16x256xf32> to vector<16x256xbf16>
    %cst_46 = arith.constant dense<0.000000e+00> : vector<8x256xf32>
    %86 = tpu.matmul %61, %85, %cst_46 {dimension_numbers = #tpu.dot_dimension_numbers<[1], [0], [0], [1], [0, 0, 1, 1], [], []>} : vector<8x16xbf16>, vector<16x256xbf16>, vector<8x256xf32> -> vector<8x256xf32>
    %cst_47 = arith.constant 2.500000e-01 : f32
    %87 = vector.broadcast %cst_47 : f32 to vector<8x256xf32>
    %88 = arith.mulf %86, %87 : vector<8x256xf32>
    %cst_48 = arith.constant 0.000000e+00 : f32
    %89 = vector.broadcast %cst_48 : f32 to vector<8x1xf32>
    %90 = arith.cmpf ogt, %19, %89 : vector<8x1xf32>
    %cst_49 = arith.constant -1.000000e+30 : f32
    %91 = vector.shape_cast %90 : vector<8x1xi1> to vector<8x1xi1>
    %92 = vector.broadcast %91 : vector<8x1xi1> to vector<8x256xi1>
    %93 = vector.broadcast %cst_49 : f32 to vector<8x256xf32>
    %94 = arith.select %92, %88, %93 : vector<8x256xi1>, vector<8x256xf32>
    %cst_50 = arith.constant dense<0xFF800000> : vector<256xf32>
    %95 = vector.multi_reduction <maximumf>, %94, %cst_50 [0] : vector<8x256xf32> to vector<256xf32>
    %96 = vector.shape_cast %95 : vector<256xf32> to vector<1x256xf32>
    %97 = vector.broadcast %96 : vector<1x256xf32> to vector<8x256xf32>
    %98 = arith.subf %88, %97 : vector<8x256xf32>
    %99 = math.exp %98 : vector<8x256xf32>
    %100 = vector.broadcast %19 : vector<8x1xf32> to vector<8x256xf32>
    %101 = arith.mulf %100, %99 : vector<8x256xf32>
    %cst_51 = arith.constant dense<0.000000e+00> : vector<256xf32>
    %102 = vector.multi_reduction <add>, %101, %cst_51 [0] : vector<8x256xf32> to vector<256xf32>
    %103 = vector.shape_cast %102 : vector<256xf32> to vector<1x256xf32>
    %cst_52 = arith.constant 1.000000e-30 : f32
    %104 = vector.broadcast %cst_52 : f32 to vector<1x256xf32>
    %105 = arith.maximumf %103, %104 : vector<1x256xf32>
    %106 = tpu.reciprocal %105 {approx = true} : vector<1x256xf32> -> vector<1x256xf32>
    %107 = vector.broadcast %106 : vector<1x256xf32> to vector<8x256xf32>
    %108 = arith.mulf %101, %107 : vector<8x256xf32>
    %109 = arith.truncf %108 : vector<8x256xf32> to vector<8x256xbf16>
    %cst_53 = arith.constant dense<0.000000e+00> : vector<16x256xf32>
    %110 = tpu.matmul %69, %109, %cst_53 {dimension_numbers = #tpu.dot_dimension_numbers<[0], [0], [1], [1], [0, 1, 1, 1], [], []>} : vector<8x16xbf16>, vector<8x256xbf16>, vector<16x256xf32> -> vector<16x256xf32>
    %111 = arith.truncf %110 : vector<16x256xf32> to vector<16x256xbf16>
    %c0_54 = arith.constant 0 : index
    %c0_55 = arith.constant 0 : index
    %112 = vector.load %arg13[%c0_54, %c0_55] : memref<32x16xbf16, #tpu.memory_space<vmem>>, vector<32x16xbf16>
    %cst_56 = arith.constant dense<0.000000e+00> : vector<32x256xf32>
    %113 = tpu.matmul %112, %111, %cst_56 {dimension_numbers = #tpu.dot_dimension_numbers<[1], [0], [0], [1], [0, 0, 1, 1], [], []>} : vector<32x16xbf16>, vector<16x256xbf16>, vector<32x256xf32> -> vector<32x256xf32>
    %c0_57 = arith.constant 0 : index
    %c0_58 = arith.constant 0 : index
    %114 = vector.load %arg14[%c0_57, %c0_58] : memref<32x1xf32, #tpu.memory_space<vmem>>, vector<32x1xf32>
    %115 = vector.broadcast %114 : vector<32x1xf32> to vector<32x256xf32>
    %116 = arith.addf %113, %115 : vector<32x256xf32>
    %cst_59 = arith.constant 0.000000e+00 : f32
    %117 = vector.broadcast %cst_59 : f32 to vector<32x256xf32>
    %118 = arith.maximumf %116, %117 : vector<32x256xf32>
    %119 = arith.truncf %118 : vector<32x256xf32> to vector<32x256xbf16>
    %c0_60 = arith.constant 0 : index
    %c0_61 = arith.constant 0 : index
    %c0_62 = arith.constant 0 : index
    %120 = vector.load %arg15[%c0_60, %c0_61, %c0_62] : memref<1x32x256xbf16, #tpu.memory_space<vmem>>, vector<1x32x256xbf16>
    %121 = vector.shape_cast %120 : vector<1x32x256xbf16> to vector<32x256xbf16>
    %122 = vector.shape_cast %119 : vector<32x256xbf16> to vector<1x32x256xbf16>
    tpu.vector_store %arg15[%c0_60, %c0_61, %c0_62], %122 {strides = array<i32>} : memref<1x32x256xbf16, #tpu.memory_space<vmem>>, vector<1x32x256xbf16>,
    return
  }
  func.func @transform_0(%arg0: i32) -> (i32, i32, i32) {
    %c0_i32 = arith.constant 0 : i32
    %c0_i32_0 = arith.constant 0 : i32
    %c0_i32_1 = arith.constant 0 : i32
    return %arg0, %c0_i32, %c0_i32_0 : i32, i32, i32
  }
  func.func @transform_1(%arg0: i32) -> (i32, i32, i32) {
    %c0_i32 = arith.constant 0 : i32
    %c0_i32_0 = arith.constant 0 : i32
    %c0_i32_1 = arith.constant 0 : i32
    return %arg0, %c0_i32, %c0_i32_0 : i32, i32, i32
  }
  func.func @transform_2(%arg0: i32) -> (i32, i32) {
    %c0_i32 = arith.constant 0 : i32
    %c0_i32_0 = arith.constant 0 : i32
    %c0_i32_1 = arith.constant 0 : i32
    return %c0_i32, %c0_i32_0 : i32, i32
  }
  func.func @transform_3(%arg0: i32) -> (i32, i32) {
    %c0_i32 = arith.constant 0 : i32
    %c0_i32_0 = arith.constant 0 : i32
    %c0_i32_1 = arith.constant 0 : i32
    return %c0_i32, %c0_i32_0 : i32, i32
  }
  func.func @transform_4(%arg0: i32) -> (i32, i32) {
    %c0_i32 = arith.constant 0 : i32
    %c0_i32_0 = arith.constant 0 : i32
    %c0_i32_1 = arith.constant 0 : i32
    return %c0_i32, %c0_i32_0 : i32, i32
  }
  func.func @transform_5(%arg0: i32) -> (i32, i32) {
    %c0_i32 = arith.constant 0 : i32
    %c0_i32_0 = arith.constant 0 : i32
    %c0_i32_1 = arith.constant 0 : i32
    return %c0_i32, %c0_i32_0 : i32, i32
  }
  func.func @transform_6(%arg0: i32) -> (i32, i32) {
    %c0_i32 = arith.constant 0 : i32
    %c0_i32_0 = arith.constant 0 : i32
    %c0_i32_1 = arith.constant 0 : i32
    return %c0_i32, %c0_i32_0 : i32, i32
  }
  func.func @transform_7(%arg0: i32) -> (i32, i32) {
    %c0_i32 = arith.constant 0 : i32
    %c0_i32_0 = arith.constant 0 : i32
    %c0_i32_1 = arith.constant 0 : i32
    return %c0_i32, %c0_i32_0 : i32, i32
  }
  func.func @transform_8(%arg0: i32) -> (i32, i32) {
    %c0_i32 = arith.constant 0 : i32
    %c0_i32_0 = arith.constant 0 : i32
    %c0_i32_1 = arith.constant 0 : i32
    return %c0_i32, %c0_i32_0 : i32, i32
  }
  func.func @transform_9(%arg0: i32) -> (i32, i32) {
    %c0_i32 = arith.constant 0 : i32
    %c0_i32_0 = arith.constant 0 : i32
    %c0_i32_1 = arith.constant 0 : i32
    return %c0_i32, %c0_i32_0 : i32, i32
  }
  func.func @transform_10(%arg0: i32) -> (i32, i32) {
    %c0_i32 = arith.constant 0 : i32
    %c0_i32_0 = arith.constant 0 : i32
    %c0_i32_1 = arith.constant 0 : i32
    return %c0_i32, %c0_i32_0 : i32, i32
  }
  func.func @transform_11(%arg0: i32) -> (i32, i32) {
    %c0_i32 = arith.constant 0 : i32
    %c0_i32_0 = arith.constant 0 : i32
    %c0_i32_1 = arith.constant 0 : i32
    return %c0_i32, %c0_i32_0 : i32, i32
  }
  func.func @transform_12(%arg0: i32) -> (i32, i32) {
    %c0_i32 = arith.constant 0 : i32
    %c0_i32_0 = arith.constant 0 : i32
    %c0_i32_1 = arith.constant 0 : i32
    return %c0_i32, %c0_i32_0 : i32, i32
  }
  func.func @transform_13(%arg0: i32) -> (i32, i32) {
    %c0_i32 = arith.constant 0 : i32
    %c0_i32_0 = arith.constant 0 : i32
    %c0_i32_1 = arith.constant 0 : i32
    return %c0_i32, %c0_i32_0 : i32, i32
  }
  func.func @transform_14(%arg0: i32) -> (i32, i32, i32) {
    %c0_i32 = arith.constant 0 : i32
    %c0_i32_0 = arith.constant 0 : i32
    %c0_i32_1 = arith.constant 0 : i32
    return %arg0, %c0_i32, %c0_i32_0 : i32, i32, i32
  }
}

</mosaic_0001>

<llo_original>
// kernel: tpu_custom_call.1
$region0: #{tpu_custom_call.1}
  #allocation0 [shape = 'u32[]', space=smem, size = 0x4, offset = 0x4, fixed_abs, tag = 'smem constant byte address 0x4 - core index']
  #allocation1 [shape = 'u32[144,128]{1,0:T(1,128)}', space=vmem, size = 0x12000, scoped, tag = 'internal scratch']
  %s0 = inlined_call_operand.vmem [shape: f32[2,32,256], index: 0, kind: input, shape index: {}]
  %s1 = inlined_call_operand.hbm [shape: f32[2,8,256], index: 1, kind: input, shape index: {}]
  %s2 = inlined_call_operand.hbm [shape: bf16[16,32], index: 2, kind: input, shape index: {}]
  %s3 = inlined_call_operand.vmem [shape: f32[16,1], index: 3, kind: input, shape index: {}]
  %s4 = inlined_call_operand.hbm [shape: bf16[16,16], index: 4, kind: input, shape index: {}]
  %s5 = inlined_call_operand.vmem [shape: f32[16,1], index: 5, kind: input, shape index: {}]
  %s6 = inlined_call_operand.vmem [shape: bf16[32,16], index: 6, kind: input, shape index: {}]
  %s7 = inlined_call_operand.hbm [shape: f32[1,16], index: 7, kind: input, shape index: {}]
  %s8 = inlined_call_operand.hbm [shape: bf16[16,16], index: 8, kind: input, shape index: {}]
  %s9 = inlined_call_operand.vmem [shape: f32[1,16], index: 9, kind: input, shape index: {}]
  %s10 = inlined_call_operand.vmem [shape: bf16[32,16], index: 10, kind: input, shape index: {}]
  %s11 = inlined_call_operand.vmem [shape: f32[1,16], index: 11, kind: input, shape index: {}]
  %s12 = inlined_call_operand.vmem [shape: bf16[32,16], index: 12, kind: input, shape index: {}]
  %s13 = inlined_call_operand.vmem [shape: f32[32,1], index: 13, kind: input, shape index: {}]
  %s14 = inlined_call_operand.hbm [shape: bf16[2,32,256], index: 14, kind: output, shape index: {}]
  %s15 = sld [smem:[#allocation0]]
  $region109: #{tpu_custom_call.1} parent=0
    _
  %s17 = ssub.s32 1, %s15
  %s18 = scalar_select 0, %s17, %s15
  $region1: #{tpu_custom_call.1} parent=0
    #allocation2 [shape = 'u8[16384]{0}', space=vmem, size = 0x4000, scoped, tag = 'input window, operand 1']
    #allocation3 [shape = 's32[2]{0}', space=sflag, size = 0x8, scoped, tag = 'scoped memory for tpu_custom_call.1']
    #allocation4 [shape = 's32[2]{0}', space=sflag, size = 0x8, scoped, tag = 'scoped memory for tpu_custom_call.1']
    #allocation5 [shape = 'u8[4096]{0}', space=vmem, size = 0x1000, scoped, tag = 'input window, operand 2, single buffered']
    #allocation6 [shape = 's32[1]{0}', space=sflag, size = 0x4, scoped, tag = 'scoped memory for tpu_custom_call.1']
    #allocation7 [shape = 'u8[4096]{0}', space=vmem, size = 0x1000, scoped, tag = 'input window, operand 4, single buffered']
    #allocation8 [shape = 'u8[512]{0}', space=vmem, size = 0x400, scoped, tag = 'input window, operand 7, single buffered']
    #allocation9 [shape = 's32[1]{0}', space=sflag, size = 0x4, scoped, tag = 'scoped memory for tpu_custom_call.1']
    #allocation10 [shape = 'u8[4096]{0}', space=vmem, size = 0x1000, scoped, tag = 'input window, operand 8, single buffered']
    #allocation11 [shape = 'u8[32768]{0}', space=vmem, size = 0x8000, scoped, tag = 'output window, operand 0']
    %19 = vsyncpa [#allocation3], 0
    %s20 = scalar_lea.sflag [#allocation3], 1
    %21 = vsyncpa %s20, 0
    %22 = vsyncpa [#allocation6], 0
    %23 = vsyncpa [#allocation9], 0
    %24 = vsyncpa [#allocation4], 0
    %s25 = scalar_lea.sflag [#allocation4], 1
    %26 = vsyncpa %s25, 0
    loop: start=0, step=1, limit=4
    $region2: #{tpu_custom_call.1} parent=1 // loop_pre_header
      _
    $region3: #{tpu_custom_call.1} parent=1 // loop_header
      %s28 = sphi 0, %s32
      %p29 = scmp.ge.s32.totalorder %s28, 4
      %s38 = sphi 0, %s40
      %s41 = sphi 0, %s38
      %s42 = sphi 0, %s41
      %s58 = sphi 0, %s42
      %s64 = sphi 0, %s66
      %s67 = sphi 0, %s64
      %s68 = sphi 0, %s67
      %s84 = sphi 0, %s68
      %s88 = sphi 0, %s88
      %s90 = sphi 0, %s88
      %s91 = sphi 0, %s90
      %s105 = sphi 0, %s91
      %s109 = sphi 0, %s109
      %s111 = sphi 0, %s109
      %s112 = sphi 0, %s111
      %s126 = sphi 0, %s112
      %s130 = sphi 0, %s130
      %s132 = sphi 0, %s130
      %s133 = sphi 0, %s132
      %s147 = sphi 0, %s133
      %s151 = sphi 0, %s151
      %s153 = sphi 0, %s151
      %s154 = sphi 0, %s153
      %s168 = sphi 0, %s154
      %s172 = sphi 0, %s172
      %s174 = sphi 0, %s172
      %s175 = sphi 0, %s174
      %s189 = sphi 0, %s175
      %s193 = sphi 0, %s193
      %s195 = sphi 0, %s193
      %s196 = sphi 0, %s195
      %s210 = sphi 0, %s196
      %s214 = sphi 0, %s214
      %s216 = sphi 0, %s214
      %s217 = sphi 0, %s216
      %s231 = sphi 0, %s217
      %s235 = sphi 0, %s235
      %s237 = sphi 0, %s235
      %s238 = sphi 0, %s237
      %s252 = sphi 0, %s238
      %s256 = sphi 0, %s256
      %s258 = sphi 0, %s256
      %s259 = sphi 0, %s258
      %s273 = sphi 0, %s259
      %s277 = sphi 0, %s277
      %s279 = sphi 0, %s277
      %s280 = sphi 0, %s279
      %s294 = sphi 0, %s280
      %s298 = sphi 0, %s298
      %s300 = sphi 0, %s298
      %s301 = sphi 0, %s300
      %s315 = sphi 0, %s301
      %s319 = sphi 0, %s319
      %s321 = sphi 0, %s319
      %s322 = sphi 0, %s321
      %s336 = sphi 0, %s322
      %s342 = sphi 0, %s344
      %s345 = sphi 0, %s342
      %s346 = sphi 0, %s345
      %s362 = sphi 0, %s346
    $region4: #{tpu_custom_call.1} parent=1 // loop_header_branch
      %31 = sbr.rel (%p29) target = $region8
    $region5: #{tpu_custom_call.1} parent=1 // loop_body
      %s33 = ssub.s32 %s28, 1
      %s34 = ssub.s32 %s28, 2
      %s35 = sadd.s32 %s28, 1
      %s36 = ssub.s32 %s28, %s35
      %p37 = scmp.eq.s32.totalorder %s36, 0
      %s39 = sadd.s32 %s38, 1
      %s40 = scalar_select %p37, %s38, %s39
      %p43 = pneg %p37
      %p44 = scmp.eq.s32.totalorder %s28, 1
      %p45 = por %p43, %p44
      %p46 = scmp.ne.s32.totalorder %s38, %s41
      %p47 = scmp.eq.s32.totalorder %s28, 0
      %p48 = por %p46, %p47
      %p49 = scmp.ne.s32.totalorder %s38, %s41
      %p50 = scmp.eq.s32.totalorder %s33, 1
      %p51 = por %p49, %p50
      %p52 = scmp.ne.s32.totalorder %s41, %s42
      %p53 = scmp.eq.s32.totalorder %s33, 0
      %p54 = por %p52, %p53
      %p55 = scmp.ne.s32.totalorder %s41, %s42
      %p56 = scmp.eq.s32.totalorder %s34, 1
      %p57 = por %p55, %p56
      %p59 = scmp.ne.s32.totalorder %s42, %s58
      %p60 = scmp.eq.s32.totalorder %s34, 0
      %p61 = por %p59, %p60
      %s62 = ssub.s32 %s28, %s35
      %p63 = scmp.eq.s32.totalorder %s62, 0
      %s65 = sadd.s32 %s64, 1
      %s66 = scalar_select %p63, %s64, %s65
      %p69 = pneg %p63
      %p70 = scmp.eq.s32.totalorder %s28, 1
      %p71 = por %p69, %p70
      %p72 = scmp.ne.s32.totalorder %s64, %s67
      %p73 = scmp.eq.s32.totalorder %s28, 0
      %p74 = por %p72, %p73
      %p75 = scmp.ne.s32.totalorder %s64, %s67
      %p76 = scmp.eq.s32.totalorder %s33, 1
      %p77 = por %p75, %p76
      %p78 = scmp.ne.s32.totalorder %s67, %s68
      %p79 = scmp.eq.s32.totalorder %s33, 0
      %p80 = por %p78, %p79
      %p81 = scmp.ne.s32.totalorder %s67, %s68
      %p82 = scmp.eq.s32.totalorder %s34, 1
      %p83 = por %p81, %p82
      %p85 = scmp.ne.s32.totalorder %s68, %s84
      %p86 = scmp.eq.s32.totalorder %s34, 0
      %p87 = por %p85, %p86
      %s89 = sadd.s32 %s88, 1
      %p92 = scmp.eq.s32.totalorder %s28, 1
      %p93 = scmp.ne.s32.totalorder %s88, %s90
      %p94 = scmp.eq.s32.totalorder %s28, 0
      %p95 = por %p93, %p94
      %p96 = scmp.ne.s32.totalorder %s88, %s90
      %p97 = scmp.eq.s32.totalorder %s33, 1
      %p98 = por %p96, %p97
      %p99 = scmp.ne.s32.totalorder %s90, %s91
      %p100 = scmp.eq.s32.totalorder %s33, 0
      %p101 = por %p99, %p100
      %p102 = scmp.ne.s32.totalorder %s90, %s91
      %p103 = scmp.eq.s32.totalorder %s34, 1
      %p104 = por %p102, %p103
      %p106 = scmp.ne.s32.totalorder %s91, %s105
      %p107 = scmp.eq.s32.totalorder %s34, 0
      %p108 = por %p106, %p107
      %s110 = sadd.s32 %s109, 1
      %p113 = scmp.eq.s32.totalorder %s28, 1
      %p114 = scmp.ne.s32.totalorder %s109, %s111
      %p115 = scmp.eq.s32.totalorder %s28, 0
      %p116 = por %p114, %p115
      %p117 = scmp.ne.s32.totalorder %s109, %s111
      %p118 = scmp.eq.s32.totalorder %s33, 1
      %p119 = por %p117, %p118
      %p120 = scmp.ne.s32.totalorder %s111, %s112
      %p121 = scmp.eq.s32.totalorder %s33, 0
      %p122 = por %p120, %p121
      %p123 = scmp.ne.s32.totalorder %s111, %s112
      %p124 = scmp.eq.s32.totalorder %s34, 1
      %p125 = por %p123, %p124
      %p127 = scmp.ne.s32.totalorder %s112, %s126
      %p128 = scmp.eq.s32.totalorder %s34, 0
      %p129 = por %p127, %p128
      %s131 = sadd.s32 %s130, 1
      %p134 = scmp.eq.s32.totalorder %s28, 1
      %p135 = scmp.ne.s32.totalorder %s130, %s132
      %p136 = scmp.eq.s32.totalorder %s28, 0
      %p137 = por %p135, %p136
      %p138 = scmp.ne.s32.totalorder %s130, %s132
      %p139 = scmp.eq.s32.totalorder %s33, 1
      %p140 = por %p138, %p139
      %p141 = scmp.ne.s32.totalorder %s132, %s133
      %p142 = scmp.eq.s32.totalorder %s33, 0
      %p143 = por %p141, %p142
      %p144 = scmp.ne.s32.totalorder %s132, %s133
      %p145 = scmp.eq.s32.totalorder %s34, 1
      %p146 = por %p144, %p145
      %p148 = scmp.ne.s32.totalorder %s133, %s147
      %p149 = scmp.eq.s32.totalorder %s34, 0
      %p150 = por %p148, %p149
      %s152 = sadd.s32 %s151, 1
      %p155 = scmp.eq.s32.totalorder %s28, 1
      %p156 = scmp.ne.s32.totalorder %s151, %s153
      %p157 = scmp.eq.s32.totalorder %s28, 0
      %p158 = por %p156, %p157
      %p159 = scmp.ne.s32.totalorder %s151, %s153
      %p160 = scmp.eq.s32.totalorder %s33, 1
      %p161 = por %p159, %p160
      %p162 = scmp.ne.s32.totalorder %s153, %s154
      %p163 = scmp.eq.s32.totalorder %s33, 0
      %p164 = por %p162, %p163
      %p165 = scmp.ne.s32.totalorder %s153, %s154
      %p166 = scmp.eq.s32.totalorder %s34, 1
      %p167 = por %p165, %p166
      %p169 = scmp.ne.s32.totalorder %s154, %s168
      %p170 = scmp.eq.s32.totalorder %s34, 0
      %p171 = por %p169, %p170
      %s173 = sadd.s32 %s172, 1
      %p176 = scmp.eq.s32.totalorder %s28, 1
      %p177 = scmp.ne.s32.totalorder %s172, %s174
      %p178 = scmp.eq.s32.totalorder %s28, 0
      %p179 = por %p177, %p178
      %p180 = scmp.ne.s32.totalorder %s172, %s174
      %p181 = scmp.eq.s32.totalorder %s33, 1
      %p182 = por %p180, %p181
      %p183 = scmp.ne.s32.totalorder %s174, %s175
      %p184 = scmp.eq.s32.totalorder %s33, 0
      %p185 = por %p183, %p184
      %p186 = scmp.ne.s32.totalorder %s174, %s175
      %p187 = scmp.eq.s32.totalorder %s34, 1
      %p188 = por %p186, %p187
      %p190 = scmp.ne.s32.totalorder %s175, %s189
      %p191 = scmp.eq.s32.totalorder %s34, 0
      %p192 = por %p190, %p191
      %s194 = sadd.s32 %s193, 1
      %p197 = scmp.eq.s32.totalorder %s28, 1
      %p198 = scmp.ne.s32.totalorder %s193, %s195
      %p199 = scmp.eq.s32.totalorder %s28, 0
      %p200 = por %p198, %p199
      %p201 = scmp.ne.s32.totalorder %s193, %s195
      %p202 = scmp.eq.s32.totalorder %s33, 1
      %p203 = por %p201, %p202
      %p204 = scmp.ne.s32.totalorder %s195, %s196
      %p205 = scmp.eq.s32.totalorder %s33, 0
      %p206 = por %p204, %p205
      %p207 = scmp.ne.s32.totalorder %s195, %s196
      %p208 = scmp.eq.s32.totalorder %s34, 1
      %p209 = por %p207, %p208
      %p211 = scmp.ne.s32.totalorder %s196, %s210
      %p212 = scmp.eq.s32.totalorder %s34, 0
      %p213 = por %p211, %p212
      %s215 = sadd.s32 %s214, 1
      %p218 = scmp.eq.s32.totalorder %s28, 1
      %p219 = scmp.ne.s32.totalorder %s214, %s216
      %p220 = scmp.eq.s32.totalorder %s28, 0
      %p221 = por %p219, %p220
      %p222 = scmp.ne.s32.totalorder %s214, %s216
      %p223 = scmp.eq.s32.totalorder %s33, 1
      %p224 = por %p222, %p223
      %p225 = scmp.ne.s32.totalorder %s216, %s217
      %p226 = scmp.eq.s32.totalorder %s33, 0
      %p227 = por %p225, %p226
      %p228 = scmp.ne.s32.totalorder %s216, %s217
      %p229 = scmp.eq.s32.totalorder %s34, 1
      %p230 = por %p228, %p229
      %p232 = scmp.ne.s32.totalorder %s217, %s231
      %p233 = scmp.eq.s32.totalorder %s34, 0
      %p234 = por %p232, %p233
      %s236 = sadd.s32 %s235, 1
      %p239 = scmp.eq.s32.totalorder %s28, 1
      %p240 = scmp.ne.s32.totalorder %s235, %s237
      %p241 = scmp.eq.s32.totalorder %s28, 0
      %p242 = por %p240, %p241
      %p243 = scmp.ne.s32.totalorder %s235, %s237
      %p244 = scmp.eq.s32.totalorder %s33, 1
      %p245 = por %p243, %p244
      %p246 = scmp.ne.s32.totalorder %s237, %s238
      %p247 = scmp.eq.s32.totalorder %s33, 0
      %p248 = por %p246, %p247
      %p249 = scmp.ne.s32.totalorder %s237, %s238
      %p250 = scmp.eq.s32.totalorder %s34, 1
      %p251 = por %p249, %p250
      %p253 = scmp.ne.s32.totalorder %s238, %s252
      %p254 = scmp.eq.s32.totalorder %s34, 0
      %p255 = por %p253, %p254
      %s257 = sadd.s32 %s256, 1
      %p260 = scmp.eq.s32.totalorder %s28, 1
      %p261 = scmp.ne.s32.totalorder %s256, %s258
      %p262 = scmp.eq.s32.totalorder %s28, 0
      %p263 = por %p261, %p262
      %p264 = scmp.ne.s32.totalorder %s256, %s258
      %p265 = scmp.eq.s32.totalorder %s33, 1
      %p266 = por %p264, %p265
      %p267 = scmp.ne.s32.totalorder %s258, %s259
      %p268 = scmp.eq.s32.totalorder %s33, 0
      %p269 = por %p267, %p268
      %p270 = scmp.ne.s32.totalorder %s258, %s259
      %p271 = scmp.eq.s32.totalorder %s34, 1
      %p272 = por %p270, %p271
      %p274 = scmp.ne.s32.totalorder %s259, %s273
      %p275 = scmp.eq.s32.totalorder %s34, 0
      %p276 = por %p274, %p275
      %s278 = sadd.s32 %s277, 1
      %p281 = scmp.eq.s32.totalorder %s28, 1
      %p282 = scmp.ne.s32.totalorder %s277, %s279
      %p283 = scmp.eq.s32.totalorder %s28, 0
      %p284 = por %p282, %p283
      %p285 = scmp.ne.s32.totalorder %s277, %s279
      %p286 = scmp.eq.s32.totalorder %s33, 1
      %p287 = por %p285, %p286
      %p288 = scmp.ne.s32.totalorder %s279, %s280
      %p289 = scmp.eq.s32.totalorder %s33, 0
      %p290 = por %p288, %p289
      %p291 = scmp.ne.s32.totalorder %s279, %s280
      %p292 = scmp.eq.s32.totalorder %s34, 1
      %p293 = por %p291, %p292
      %p295 = scmp.ne.s32.totalorder %s280, %s294
      %p296 = scmp.eq.s32.totalorder %s34, 0
      %p297 = por %p295, %p296
      %s299 = sadd.s32 %s298, 1
      %p302 = scmp.eq.s32.totalorder %s28, 1
      %p303 = scmp.ne.s32.totalorder %s298, %s300
      %p304 = scmp.eq.s32.totalorder %s28, 0
      %p305 = por %p303, %p304
      %p306 = scmp.ne.s32.totalorder %s298, %s300
      %p307 = scmp.eq.s32.totalorder %s33, 1
      %p308 = por %p306, %p307
      %p309 = scmp.ne.s32.totalorder %s300, %s301
      %p310 = scmp.eq.s32.totalorder %s33, 0
      %p311 = por %p309, %p310
      %p312 = scmp.ne.s32.totalorder %s300, %s301
      %p313 = scmp.eq.s32.totalorder %s34, 1
      %p314 = por %p312, %p313
      %p316 = scmp.ne.s32.totalorder %s301, %s315
      %p317 = scmp.eq.s32.totalorder %s34, 0
      %p318 = por %p316, %p317
      %s320 = sadd.s32 %s319, 1
      %p323 = scmp.eq.s32.totalorder %s28, 1
      %p324 = scmp.ne.s32.totalorder %s319, %s321
      %p325 = scmp.eq.s32.totalorder %s28, 0
      %p326 = por %p324, %p325
      %p327 = scmp.ne.s32.totalorder %s319, %s321
      %p328 = scmp.eq.s32.totalorder %s33, 1
      %p329 = por %p327, %p328
      %p330 = scmp.ne.s32.totalorder %s321, %s322
      %p331 = scmp.eq.s32.totalorder %s33, 0
      %p332 = por %p330, %p331
      %p333 = scmp.ne.s32.totalorder %s321, %s322
      %p334 = scmp.eq.s32.totalorder %s34, 1
      %p335 = por %p333, %p334
      %p337 = scmp.ne.s32.totalorder %s322, %s336
      %p338 = scmp.eq.s32.totalorder %s34, 0
      %p339 = por %p337, %p338
      %s340 = ssub.s32 %s28, %s35
      %p341 = scmp.eq.s32.totalorder %s340, 0
      %s343 = sadd.s32 %s342, 1
      %s344 = scalar_select %p341, %s342, %s343
      %p347 = pneg %p341
      %p348 = scmp.eq.s32.totalorder %s28, 1
      %p349 = por %p347, %p348
      %p350 = scmp.ne.s32.totalorder %s342, %s345
      %p351 = scmp.eq.s32.totalorder %s28, 0
      %p352 = por %p350, %p351
      %p353 = scmp.ne.s32.totalorder %s342, %s345
      %p354 = scmp.eq.s32.totalorder %s33, 1
      %p355 = por %p353, %p354
      %p356 = scmp.ne.s32.totalorder %s345, %s346
      %p357 = scmp.eq.s32.totalorder %s33, 0
      %p358 = por %p356, %p357
      %p359 = scmp.ne.s32.totalorder %s345, %s346
      %p360 = scmp.eq.s32.totalorder %s34, 1
      %p361 = por %p359, %p360
      %p363 = scmp.ne.s32.totalorder %s346, %s362
      %p364 = scmp.eq.s32.totalorder %s34, 0
      %p365 = por %p363, %p364
      %p366 = scmp.le.s32.totalorder 1, %s28
      %p367 = scmp.lt.s32.totalorder %s28, 3
      %p368 = pnand %p366, %p367
      %p369 = pneg %p368
      // Predicated region
      $region9: #{tpu_custom_call.1} parent=5 // pred_check
        _
      $region10: #{tpu_custom_call.1} parent=5 // pred_check_branch
        %371 = sbr.rel (%p368) target = $region12
      $region11: #{tpu_custom_call.1} parent=5 // pred_region
        %s372 = ssub.s32 %s28, 1
        // Predicated region
        $region13: #{tpu_custom_call.1} parent=11 // pred_check
          %p373 = pneg %p101
        $region14: #{tpu_custom_call.1} parent=11 // pred_check_branch
          %375 = sbr.rel (%p373) target = $region16
        $region15: #{tpu_custom_call.1} parent=11 // pred_region
          %s377 = ssub.s32 128, 128
          %378 = vsyncadd [#allocation6], %s377
          %s379 = sshll.u32 [#allocation5], 4
          %s380 = int_to_ptr.vmem [resolvable:$true] %s379
          %385 = dma.hbm_to_vmem [thread:$0]  %s2, 128, %s380, [#allocation6], 64, 64, 4
        $region16: #{tpu_custom_call.1} parent=11 // pred_fallthru
          _
        // Predicated region
        $region17: #{tpu_custom_call.1} parent=11 // pred_check
          %p386 = pneg %p122
        $region18: #{tpu_custom_call.1} parent=11 // pred_check_branch
          %388 = sbr.rel (%p386) target = $region20
        $region19: #{tpu_custom_call.1} parent=11 // pred_region
          _
        $region20: #{tpu_custom_call.1} parent=11 // pred_fallthru
          _
        // Predicated region
        $region21: #{tpu_custom_call.1} parent=11 // pred_check
          %p389 = pneg %p143
        $region22: #{tpu_custom_call.1} parent=11 // pred_check_branch
          %391 = sbr.rel (%p389) target = $region24
        $region23: #{tpu_custom_call.1} parent=11 // pred_region
          %s393 = ssub.s32 128, 128
          %394 = vsyncadd [#allocation6], %s393
          %s395 = sshll.u32 [#allocation7], 4
          %s396 = int_to_ptr.vmem [resolvable:$true] %s395
          %401 = dma.hbm_to_vmem [thread:$0]  %s4, 128, %s396, [#allocation6], 64, 64, 4
        $region24: #{tpu_custom_call.1} parent=11 // pred_fallthru
          _
        // Predicated region
        $region25: #{tpu_custom_call.1} parent=11 // pred_check
          %p402 = pneg %p164
        $region26: #{tpu_custom_call.1} parent=11 // pred_check_branch
          %404 = sbr.rel (%p402) target = $region28
        $region27: #{tpu_custom_call.1} parent=11 // pred_region
          _
        $region28: #{tpu_custom_call.1} parent=11 // pred_fallthru
          _
        // Predicated region
        $region29: #{tpu_custom_call.1} parent=11 // pred_check
          %p405 = pneg %p185
        $region30: #{tpu_custom_call.1} parent=11 // pred_check_branch
          %407 = sbr.rel (%p405) target = $region32
        $region31: #{tpu_custom_call.1} parent=11 // pred_region
          _
        $region32: #{tpu_custom_call.1} parent=11 // pred_fallthru
          _
        // Predicated region
        $region33: #{tpu_custom_call.1} parent=11 // pred_check
          %p408 = pneg %p206
        $region34: #{tpu_custom_call.1} parent=11 // pred_check_branch
          %410 = sbr.rel (%p408) target = $region36
        $region35: #{tpu_custom_call.1} parent=11 // pred_region
          %s412 = ssub.s32 16, 16
          %413 = vsyncadd [#allocation9], %s412
          %s415 = sshll.u32 [#allocation8], 4
          %s416 = int_to_ptr.vmem [resolvable:$true] %s415
          %418 = dma.hbm_to_vmem [thread:$0]  %s7, 16, %s416, [#allocation9]
        $region36: #{tpu_custom_call.1} parent=11 // pred_fallthru
          _
        // Predicated region
        $region37: #{tpu_custom_call.1} parent=11 // pred_check
          %p419 = pneg %p227
        $region38: #{tpu_custom_call.1} parent=11 // pred_check_branch
          %421 = sbr.rel (%p419) target = $region40
        $region39: #{tpu_custom_call.1} parent=11 // pred_region
          %s423 = ssub.s32 128, 128
          %424 = vsyncadd [#allocation9], %s423
          %s425 = sshll.u32 [#allocation10], 4
          %s426 = int_to_ptr.vmem [resolvable:$true] %s425
          %431 = dma.hbm_to_vmem [thread:$0]  %s8, 128, %s426, [#allocation9], 64, 64, 4
        $region40: #{tpu_custom_call.1} parent=11 // pred_fallthru
          _
        // Predicated region
        $region41: #{tpu_custom_call.1} parent=11 // pred_check
          %p432 = pneg %p248
        $region42: #{tpu_custom_call.1} parent=11 // pred_check_branch
          %434 = sbr.rel (%p432) target = $region44
        $region43: #{tpu_custom_call.1} parent=11 // pred_region
          _
        $region44: #{tpu_custom_call.1} parent=11 // pred_fallthru
          _
        // Predicated region
        $region45: #{tpu_custom_call.1} parent=11 // pred_check
          %p435 = pneg %p269
        $region46: #{tpu_custom_call.1} parent=11 // pred_check_branch
          %437 = sbr.rel (%p435) target = $region48
        $region47: #{tpu_custom_call.1} parent=11 // pred_region
          _
        $region48: #{tpu_custom_call.1} parent=11 // pred_fallthru
          _
        // Predicated region
        $region49: #{tpu_custom_call.1} parent=11 // pred_check
          %p438 = pneg %p290
        $region50: #{tpu_custom_call.1} parent=11 // pred_check_branch
          %440 = sbr.rel (%p438) target = $region52
        $region51: #{tpu_custom_call.1} parent=11 // pred_region
          _
        $region52: #{tpu_custom_call.1} parent=11 // pred_fallthru
          _
        // Predicated region
        $region53: #{tpu_custom_call.1} parent=11 // pred_check
          %p441 = pneg %p311
        $region54: #{tpu_custom_call.1} parent=11 // pred_check_branch
          %443 = sbr.rel (%p441) target = $region56
        $region55: #{tpu_custom_call.1} parent=11 // pred_region
          _
        $region56: #{tpu_custom_call.1} parent=11 // pred_fallthru
          _
        // Predicated region
        $region57: #{tpu_custom_call.1} parent=11 // pred_check
          %p444 = pneg %p332
        $region58: #{tpu_custom_call.1} parent=11 // pred_check_branch
          %446 = sbr.rel (%p444) target = $region60
        $region59: #{tpu_custom_call.1} parent=11 // pred_region
          _
        $region60: #{tpu_custom_call.1} parent=11 // pred_fallthru
          _
      $region12: #{tpu_custom_call.1} parent=5 // pred_fallthru
        _
      %p447 = scmp.lt.s32.totalorder %s28, 2
      // Predicated region
      $region61: #{tpu_custom_call.1} parent=5 // pred_check
        %p448 = pneg %p447
      $region62: #{tpu_custom_call.1} parent=5 // pred_check_branch
        %450 = sbr.rel (%p448) target = $region64
      $region63: #{tpu_custom_call.1} parent=5 // pred_region
        // Predicated region
        $region65: #{tpu_custom_call.1} parent=63 // pred_check
          %p451 = pneg %p48
        $region66: #{tpu_custom_call.1} parent=63 // pred_check_branch
          %453 = sbr.rel (%p451) target = $region68
        $region67: #{tpu_custom_call.1} parent=63 // pred_region
          %p454 = scmp.lt.s32.totalorder %s28, 1
          %s455 = scalar_select %p454, %s28, 1
          %s456 = smul.addr %s455, 8
          %s457 = smul.addr %s456, 8
          %s458 = scalar_lea.vmem %s0, %s457
        $region68: #{tpu_custom_call.1} parent=63 // pred_fallthru
          _
        // Predicated region
        $region69: #{tpu_custom_call.1} parent=63 // pred_check
          %p459 = pneg %p74
        $region70: #{tpu_custom_call.1} parent=63 // pred_check_branch
          %461 = sbr.rel (%p459) target = $region72
        $region71: #{tpu_custom_call.1} parent=63 // pred_region
          %s462 = sand.u32 %s64, 1
          %s463 = scalar_lea.sflag [#allocation3], %s462
          %s464 = sand.u32 %s64, 1
          %s465 = smul.addr %s464, 16
          %s466 = scalar_lea.vmem [#allocation2], %s465
          %s468 = ssub.s32 256, 256
          %469 = vsyncadd %s463, %s468
          %s470 = smul.addr %s28, 2
          %s471 = smul.addr %s470, 128
          %s472 = scalar_lea.hbm %s1, %s471
          %s474 = sshll.u32 %s466, 4
          %s475 = int_to_ptr.vmem [resolvable:$true] %s474
          %477 = dma.hbm_to_vmem [thread:$0]  %s472, 256, %s475, %s463
        $region72: #{tpu_custom_call.1} parent=63 // pred_fallthru
          _
      $region64: #{tpu_custom_call.1} parent=5 // pred_fallthru
        _
      %p478 = scmp.le.s32.totalorder 1, %s28
      %p479 = scmp.lt.s32.totalorder %s28, 3
      %p480 = pnand %p478, %p479
      %p481 = pneg %p480
      // Predicated region
      $region73: #{tpu_custom_call.1} parent=5 // pred_check
        _
      $region74: #{tpu_custom_call.1} parent=5 // pred_check_branch
        %483 = sbr.rel (%p480) target = $region76
      $region75: #{tpu_custom_call.1} parent=5 // pred_region
        %s484 = ssub.s32 %s28, 1
        %s485 = sand.u32 %s67, 1
        %s486 = scalar_lea.sflag [#allocation3], %s485
        %s487 = sand.u32 %s67, 1
        %s488 = smul.addr %s487, 16
        %s489 = scalar_lea.vmem [#allocation2], %s488
        // Predicated region
        $region77: #{tpu_custom_call.1} parent=75 // pred_check
          %p490 = pneg %p80
        $region78: #{tpu_custom_call.1} parent=75 // pred_check_branch
          %492 = sbr.rel (%p490) target = $region80
        $region79: #{tpu_custom_call.1} parent=75 // pred_region
          %493 = dma.done %s486, 256
        $region80: #{tpu_custom_call.1} parent=75 // pred_fallthru
          _
        // Predicated region
        $region81: #{tpu_custom_call.1} parent=75 // pred_check
          %p494 = pneg %p101
        $region82: #{tpu_custom_call.1} parent=75 // pred_check_branch
          %496 = sbr.rel (%p494) target = $region84
        $region83: #{tpu_custom_call.1} parent=75 // pred_region
          %497 = dma.done [#allocation6], 128
        $region84: #{tpu_custom_call.1} parent=75 // pred_fallthru
          _
        // Predicated region
        $region85: #{tpu_custom_call.1} parent=75 // pred_check
          %p498 = pneg %p143
        $region86: #{tpu_custom_call.1} parent=75 // pred_check_branch
          %500 = sbr.rel (%p498) target = $region88
        $region87: #{tpu_custom_call.1} parent=75 // pred_region
          %501 = dma.done [#allocation6], 128
        $region88: #{tpu_custom_call.1} parent=75 // pred_fallthru
          _
        // Predicated region
        $region89: #{tpu_custom_call.1} parent=75 // pred_check
          %p502 = pneg %p206
        $region90: #{tpu_custom_call.1} parent=75 // pred_check_branch
          %504 = sbr.rel (%p502) target = $region92
        $region91: #{tpu_custom_call.1} parent=75 // pred_region
          %505 = dma.done [#allocation9], 16
        $region92: #{tpu_custom_call.1} parent=75 // pred_fallthru
          _
        // Predicated region
        $region93: #{tpu_custom_call.1} parent=75 // pred_check
          %p506 = pneg %p227
        $region94: #{tpu_custom_call.1} parent=75 // pred_check_branch
          %508 = sbr.rel (%p506) target = $region96
        $region95: #{tpu_custom_call.1} parent=75 // pred_region
          %509 = dma.done [#allocation9], 128
        $region96: #{tpu_custom_call.1} parent=75 // pred_fallthru
          _
        %p510 = scmp.lt.s32.totalorder %s33, 1
        %s511 = scalar_select %p510, %s33, 1
        %s512 = smul.addr %s511, 8
        %s513 = smul.addr %s512, 8
        %s514 = scalar_lea.vmem %s0, %s513
        %p515 = pneg %p54
        %p516 = pneg %p51
        %s517 = sand.u32 %s67, 1
        %s518 = scalar_lea.sflag [#allocation3], %s517
        %s519 = sand.u32 %s67, 1
        %s520 = smul.addr %s519, 16
        %s521 = scalar_lea.vmem [#allocation2], %s520
        %p522 = pneg %p80
        %p523 = pneg %p77
        %p524 = pneg %p101
        %p525 = pneg %p98
        %p526 = pneg %p122
        %p527 = pneg %p119
        %p528 = pneg %p143
        %p529 = pneg %p140
        %p530 = pneg %p164
        %p531 = pneg %p161
        %p532 = pneg %p185
        %p533 = pneg %p182
        %p534 = pneg %p206
        %p535 = pneg %p203
        %p536 = pneg %p227
        %p537 = pneg %p224
        %p538 = pneg %p248
        %p539 = pneg %p245
        %p540 = pneg %p269
        %p541 = pneg %p266
        %p542 = pneg %p290
        %p543 = pneg %p287
        %p544 = pneg %p311
        %p545 = pneg %p308
        %p546 = pneg %p332
        %p547 = pneg %p329
        %p548 = pneg %p358
        %p549 = pneg %p355
        %s550 = sand.u32 %s345, 1
        %s551 = scalar_lea.sflag [#allocation4], %s550
        %s552 = sand.u32 %s345, 1
        %s553 = smul.addr %s552, 32
        %s554 = scalar_lea.vmem [#allocation11], %s553
        %p555 = scmp.lt.s32.totalorder %s33, 1
        %s556 = scalar_select %p555, %s33, 1
        %s557 = smul.addr %s556, 8
        %s558 = smul.addr %s557, 8
        %s559 = scalar_lea.vmem %s0, %s558
        %v561 = vld [vmem:[%s559] sm:$0xff]
        %v562 = vld [vmem:[%s559 + $0x8] sm:$0xff]
        %v563 = vld [vmem:[%s559 + $0x10] sm:$0xff]
        %v564 = vld [vmem:[%s559 + $0x18] sm:$0xff]
        %v565 = vld [vmem:[%s559 + $0x20] sm:$0xff]
        %v566 = vld [vmem:[%s559 + $0x28] sm:$0xff]
        %v567 = vld [vmem:[%s559 + $0x30] sm:$0xff]
        %v568 = vld [vmem:[%s559 + $0x38] sm:$0xff]
        %v569 = vpack.c.bf16 %v563, %v561
        %v570 = vpack.c.bf16 %v564, %v562
        %v571 = vpack.c.bf16 %v567, %v565
        %v572 = vpack.c.bf16 %v568, %v566
        %v573 = vld [vmem:[%s489] sm:$0xff]
        %v574 = vld [vmem:[%s489 + $0x8] sm:$0xff]
        %v575 = vrot.slane %v573, 4
        %v576 = vmax.f32 %v573, %v575
        %v577 = vrot.slane %v576, 2
        %v578 = vmax.f32 %v576, %v577
        %v579 = vrot.slane %v578, 1
        %v580 = vmax.f32 %v578, %v579
        %v581 = vrot.slane %v574, 4
        %v582 = vmax.f32 %v574, %v581
        %v583 = vrot.slane %v582, 2
        %v584 = vmax.f32 %v582, %v583
        %v585 = vrot.slane %v584, 1
        %v586 = vmax.f32 %v584, %v585
        %v587 = vlaneseq
        %v588 = vshrl.u32 %v587, 7
        %vm589 = vcmp.ge.f32.partialorder %v573, %v580
        %vm590 = vcmp.ge.f32.partialorder %v574, %v586
        %v591 = vsel %vm589, %v588, 8
        %v592 = vsel %vm590, %v588, 8
        %v593 = vrot.slane %v591, 4
        %vm594 = vcmp.lt.s32.totalorder %v591, %v593
        %v595 = vsel %vm594, %v591, %v593
        %v596 = vrot.slane %v595, 2
        %vm597 = vcmp.lt.s32.totalorder %v595, %v596
        %v598 = vsel %vm597, %v595, %v596
        %v599 = vrot.slane %v598, 1
        %vm600 = vcmp.lt.s32.totalorder %v598, %v599
        %v601 = vsel %vm600, %v598, %v599
        %v602 = vrot.slane %v592, 4
        %vm603 = vcmp.lt.s32.totalorder %v592, %v602
        %v604 = vsel %vm603, %v592, %v602
        %v605 = vrot.slane %v604, 2
        %vm606 = vcmp.lt.s32.totalorder %v604, %v605
        %v607 = vsel %vm606, %v604, %v605
        %v608 = vrot.slane %v607, 1
        %vm609 = vcmp.lt.s32.totalorder %v607, %v608
        %v610 = vsel %vm609, %v607, %v608
        %vm611 = vcmp.eq.s32.totalorder %v588, %v601
        %vm612 = vcmp.eq.s32.totalorder %v588, %v610
        %v613 = vsel %vm611, 1, 0
        %v614 = vsel %vm612, 1, 0
        %v615 = vcvt.s32.f32 %v613
        %v616 = vcvt.s32.f32 %v614
        %v617 = vadd.f32 %v615, %v616
        %618 = vadd.xlane.f32.xlu0 %v617
        %v619 = vpop.xlane.xlu0 %618
        %vm620 = vcmp.gt.f32.partialorder %v615, 0.0
        %vm621 = vcmp.gt.f32.partialorder %v616, 0.0
        %v622 = vsel %vm620, %v573, -1e+30
        %v623 = vsel %vm621, %v574, -1e+30
        %v624 = vmax.f32 %v622, %v623
        %625 = vmax.xlane.f32.xlu0 %v624
        %v626 = vpop.xlane.xlu0 %625
        %vm627 = vcmp.gt.f32.partialorder %v626, -1e+29
        %v628 = vsel %vm627, %v626, 0.0
        %v629 = vsub.f32 %v573, %v628
        %v630 = vsub.f32 %v574, %v628
        %v631 = vmin.f32 %v629, 0.0
        %v632 = vmin.f32 %v630, 0.0
        %v633 = vmul.f32 %v631, 1.442695
        %v634 = vpow.pop %v633
        %v635 = vmul.f32 %v632, 1.442695
        %v636 = vpow.pop %v635
        %v637 = vmul.f32 %v615, %v634
        %v638 = vmul.f32 %v616, %v636
        %v639 = vadd.f32 %v637, %v638
        %640 = vadd.xlane.f32.xlu0 %v639
        %v641 = vpop.xlane.xlu0 %640
        %v642 = vpack.c.bf16 %v637, %v637
        %v643 = vpack.c.bf16 %v638, %v638
        %644 = vmatprep.subr.bf16.mxu0 0
        %645 = vmatpush1.bf16.xpose.msra.mxu0 0
        %646 = vmatprep.subr.bf16.mxu0 0
        %647 = vmatpush1.bf16.xpose.msra.mxu0 0
        %648 = vmatprep.subr.bf16.mxu0 0
        %649 = vmatpush1.bf16.xpose.msra.mxu0 0
        %650 = vmatprep.subr.bf16.mxu0 0
        %651 = vmatpush1.bf16.xpose.msra.mxu0 0
        %652 = vmatprep.subr.bf16.mxu0 0
        %653 = vmatpush1.bf16.xpose.msra.mxu0 0
        %654 = vmatprep.subr.bf16.mxu0 0
        %655 = vmatpush1.bf16.xpose.msra.mxu0 0
        %656 = vmatprep.subr.bf16.mxu0 %v572
        %657 = vmatpush1.bf16.xpose.msra.mxu0 %v571
        %658 = vmatprep.subr.bf16.mxu0 %v570
        %659 = vmatpush1.bf16.xpose.msra.mxu0 %v569
        %660 = vmatprep.subr.bf16.mxu0 0
        %661 = vmatpush2.bf16.xpose.msra.mxu0 0
        %662 = vmatprep.subr.bf16.mxu0 0
        %663 = vmatpush2.bf16.xpose.msra.mxu0 0
        %664 = vmatprep.subr.bf16.mxu0 0
        %665 = vmatpush2.bf16.xpose.msra.mxu0 0
        %666 = vmatprep.subr.bf16.mxu0 0
        %667 = vmatpush2.bf16.xpose.msra.mxu0 0
        %668 = vmatprep.subr.bf16.mxu0 0
        %669 = vmatpush2.bf16.xpose.msra.mxu0 0
        %670 = vmatprep.subr.bf16.mxu0 0
        %671 = vmatpush2.bf16.xpose.msra.mxu0 0
        %672 = vmatprep.subr.bf16.mxu0 0
        %673 = vmatpush2.bf16.xpose.msra.mxu0 0
        %674 = vmatprep.subr.bf16.mxu0 0
        %675 = vmatpush2.bf16.xpose.msra.mxu0 0
        %676 = vmatprep.mubr.bf16.mxu0 %v643
        %677 = vmatmul.mubr.bf16.gmra.mxu0 %v642
        %v678 = vpop.f32.mrf.mxu0
        %v679 = vadd.f32 0.0, %v678
        %v680 = vpop.f32.mrf.mxu0
        %v681 = vpop.f32.mrf.mxu0
        %v682 = vpop.f32.mrf.mxu0
        %683 = vdwg.mxu0
        %v684 = vmax.f32 %v641, 1e-30
        %v685 = vrcp.pop %v684
        %v686 = vmul.f32 %v679, %v685
        %v687 = vpack.c.bf16 %v686, %v686
        %v688 = vld [vmem:[%s6] sm:$0xf]
        %v689 = vld [vmem:[%s6 + $0x4] sm:$0xf]
        %v690 = vld [vmem:[%s6 + $0x8] sm:$0xf]
        %v691 = vld [vmem:[%s6 + $0xc] sm:$0xf]
        %v692 = vld [vmem:[#allocation8] sm:$0x1]
        %v694 = vlaneseq
        %v695 = vshrl.u32 %v694, 7
        %v696 = vsub.s32 0, %v695
        %v697 = vrot.slane %v692, %v696
        %v703 = vunpack.c.l.b16 %v688
        %v704 = vunpack.c.l.b16 %v689
        %v705 = vunpack.c.l.b16 %v690
        %v706 = vunpack.c.l.b16 %v691
        %v707 = vpack.c.b16 %v704, %v703
        %v708 = vpack.c.b16 %v706, %v705
        %vm711 = vcmask 261120
        %v713 = vsel %vm711, %v687, 0
        %715 = vmatprep.subr.bf16.mxu0 0
        %716 = vmatpush1.bf16.msra.mxu0 0
        %717 = vmatprep.subr.bf16.mxu0 0
        %718 = vmatpush1.bf16.msra.mxu0 0
        %719 = vmatprep.subr.bf16.mxu0 0
        %720 = vmatpush1.bf16.msra.mxu0 0
        %721 = vmatprep.subr.bf16.mxu0 0
        %722 = vmatpush1.bf16.msra.mxu0 0
        %723 = vmatprep.subr.bf16.mxu0 0
        %724 = vmatpush1.bf16.msra.mxu0 0
        %725 = vmatprep.subr.bf16.mxu0 0
        %726 = vmatpush1.bf16.msra.mxu0 0
        %727 = vmatprep.subr.bf16.mxu0 0
        %728 = vmatpush1.bf16.msra.mxu0 %v708
        %729 = vmatprep.subr.bf16.mxu0 0
        %730 = vmatpush1.bf16.msra.mxu0 %v707
        %731 = vmatprep.subr.bf16.mxu0 0
        %732 = vmatpush2.bf16.msra.mxu0 0
        %733 = vmatprep.subr.bf16.mxu0 0
        %734 = vmatpush2.bf16.msra.mxu0 0
        %735 = vmatprep.subr.bf16.mxu0 0
        %736 = vmatpush2.bf16.msra.mxu0 0
        %737 = vmatprep.subr.bf16.mxu0 0
        %738 = vmatpush2.bf16.msra.mxu0 0
        %739 = vmatprep.subr.bf16.mxu0 0
        %740 = vmatpush2.bf16.msra.mxu0 0
        %741 = vmatprep.subr.bf16.mxu0 0
        %742 = vmatpush2.bf16.msra.mxu0 0
        %743 = vmatprep.subr.bf16.mxu0 0
        %744 = vmatpush2.bf16.msra.mxu0 0
        %745 = vmatprep.subr.bf16.mxu0 0
        %746 = vmatpush2.bf16.msra.mxu0 0
        %747 = vmatprep.mubr.bf16.mxu0 0
        %748 = vmatmul.mubr.bf16.gmra.mxu0 %v713
        %v749 = vpop.f32.mrf.mxu0
        %v750 = vadd.f32 %v697, %v749
        %v751 = vpop.f32.mrf.mxu0
        %v752 = vpop.f32.mrf.mxu0
        %v753 = vpop.f32.mrf.mxu0
        %754 = vdwg.mxu0
        %v755 = vmax.f32 %v750, 0.0
        %v756 = vpack.c.bf16 %v755, %v755
        %v757 = vld [vmem:[#allocation10] sm:$0xf]
        %v758 = vld [vmem:[#allocation10 + $0x4] sm:$0xf]
        %v759 = vld [vmem:[%s9] sm:$0x1]
        %v761 = vlaneseq
        %v762 = vshrl.u32 %v761, 7
        %v763 = vsub.s32 0, %v762
        %v764 = vrot.slane %v759, %v763
        %v768 = vunpack.c.l.b16 %v757
        %v769 = vunpack.c.l.b16 %v758
        %v770 = vpack.c.b16 %v769, %v768
        %vm772 = vcmask 130048
        %v774 = vsel %vm772, %v756, 0
        %776 = vmatprep.subr.bf16.mxu0 0
        %777 = vmatpush1.bf16.msra.mxu0 0
        %778 = vmatprep.subr.bf16.mxu0 0
        %779 = vmatpush1.bf16.msra.mxu0 0
        %780 = vmatprep.subr.bf16.mxu0 0
        %781 = vmatpush1.bf16.msra.mxu0 0
        %782 = vmatprep.subr.bf16.mxu0 0
        %783 = vmatpush1.bf16.msra.mxu0 0
        %784 = vmatprep.subr.bf16.mxu0 0
        %785 = vmatpush1.bf16.msra.mxu0 0
        %786 = vmatprep.subr.bf16.mxu0 0
        %787 = vmatpush1.bf16.msra.mxu0 0
        %788 = vmatprep.subr.bf16.mxu0 0
        %789 = vmatpush1.bf16.msra.mxu0 0
        %790 = vmatprep.subr.bf16.mxu0 0
        %791 = vmatpush1.bf16.msra.mxu0 %v770
        %792 = vmatprep.subr.bf16.mxu0 0
        %793 = vmatpush2.bf16.msra.mxu0 0
        %794 = vmatprep.subr.bf16.mxu0 0
        %795 = vmatpush2.bf16.msra.mxu0 0
        %796 = vmatprep.subr.bf16.mxu0 0
        %797 = vmatpush2.bf16.msra.mxu0 0
        %798 = vmatprep.subr.bf16.mxu0 0
        %799 = vmatpush2.bf16.msra.mxu0 0
        %800 = vmatprep.subr.bf16.mxu0 0
        %801 = vmatpush2.bf16.msra.mxu0 0
        %802 = vmatprep.subr.bf16.mxu0 0
        %803 = vmatpush2.bf16.msra.mxu0 0
        %804 = vmatprep.subr.bf16.mxu0 0
        %805 = vmatpush2.bf16.msra.mxu0 0
        %806 = vmatprep.subr.bf16.mxu0 0
        %807 = vmatpush2.bf16.msra.mxu0 0
        %808 = vmatprep.mubr.bf16.mxu0 0
        %809 = vmatmul.mubr.bf16.gmra.mxu0 %v774
        %v810 = vpop.f32.mrf.mxu0
        %v811 = vadd.f32 %v764, %v810
        %v812 = vpop.f32.mrf.mxu0
        %v813 = vpop.f32.mrf.mxu0
        %v814 = vpop.f32.mrf.mxu0
        %815 = vdwg.mxu0
        %v816 = vmax.f32 %v811, 0.0
        %v817 = vpack.c.bf16 %v816, %v816
        %v818 = vld [vmem:[%s10] sm:$0xf]
        %v819 = vld [vmem:[%s10 + $0x4] sm:$0xf]
        %v820 = vld [vmem:[%s10 + $0x8] sm:$0xf]
        %v821 = vld [vmem:[%s10 + $0xc] sm:$0xf]
        %v822 = vld [vmem:[%s11] sm:$0x1]
        %v824 = vlaneseq
        %v825 = vshrl.u32 %v824, 7
        %v826 = vsub.s32 0, %v825
        %v827 = vrot.slane %v822, %v826
        %v833 = vunpack.c.l.b16 %v818
        %v834 = vunpack.c.l.b16 %v819
        %v835 = vunpack.c.l.b16 %v820
        %v836 = vunpack.c.l.b16 %v821
        %v837 = vpack.c.b16 %v834, %v833
        %v838 = vpack.c.b16 %v836, %v835
        %841 = vmatprep.subr.bf16.mxu0 0
        %842 = vmatpush1.bf16.msra.mxu0 0
        %843 = vmatprep.subr.bf16.mxu0 0
        %844 = vmatpush1.bf16.msra.mxu0 0
        %845 = vmatprep.subr.bf16.mxu0 0
        %846 = vmatpush1.bf16.msra.mxu0 0
        %847 = vmatprep.subr.bf16.mxu0 0
        %848 = vmatpush1.bf16.msra.mxu0 0
        %849 = vmatprep.subr.bf16.mxu0 0
        %850 = vmatpush1.bf16.msra.mxu0 0
        %851 = vmatprep.subr.bf16.mxu0 0
        %852 = vmatpush1.bf16.msra.mxu0 0
        %853 = vmatprep.subr.bf16.mxu0 0
        %854 = vmatpush1.bf16.msra.mxu0 %v838
        %855 = vmatprep.subr.bf16.mxu0 0
        %856 = vmatpush1.bf16.msra.mxu0 %v837
        %857 = vmatprep.subr.bf16.mxu0 0
        %858 = vmatpush2.bf16.msra.mxu0 0
        %859 = vmatprep.subr.bf16.mxu0 0
        %860 = vmatpush2.bf16.msra.mxu0 0
        %861 = vmatprep.subr.bf16.mxu0 0
        %862 = vmatpush2.bf16.msra.mxu0 0
        %863 = vmatprep.subr.bf16.mxu0 0
        %864 = vmatpush2.bf16.msra.mxu0 0
        %865 = vmatprep.subr.bf16.mxu0 0
        %866 = vmatpush2.bf16.msra.mxu0 0
        %867 = vmatprep.subr.bf16.mxu0 0
        %868 = vmatpush2.bf16.msra.mxu0 0
        %869 = vmatprep.subr.bf16.mxu0 0
        %870 = vmatpush2.bf16.msra.mxu0 0
        %871 = vmatprep.subr.bf16.mxu0 0
        %872 = vmatpush2.bf16.msra.mxu0 0
        %873 = vmatprep.mubr.bf16.mxu0 0
        %874 = vmatmul.mubr.bf16.gmra.mxu0 %v713
        %v875 = vpop.f32.mrf.mxu0
        %v876 = vadd.f32 %v827, %v875
        %v877 = vpop.f32.mrf.mxu0
        %v878 = vpop.f32.mrf.mxu0
        %v879 = vpop.f32.mrf.mxu0
        %880 = vdwg.mxu0
        %v881 = vmax.f32 %v876, 0.0
        %v882 = vpack.c.bf16 %v881, %v881
        %v883 = vld [vmem:[#allocation5] sm:$0xf]
        %v884 = vld [vmem:[#allocation5 + $0x4] sm:$0xf]
        %v885 = vld [vmem:[%s3] sm:$0xff]
        %v886 = vld [vmem:[%s3 + $0x8] sm:$0xff]
        %888 = vset.pattern.permute.xlu0 0
        %889 = vperm.xlu0 %888, %v885
        %v890 = vpop.permute.xlu0 %889
        %893 = vset.pattern.permute.xlu0 0
        %894 = vperm.xlu0 %893, %v886
        %v895 = vpop.permute.xlu0 %894
        %v899 = vunpack.c.l.b16 %v883
        %v900 = vunpack.c.l.b16 %v884
        %v901 = vpack.c.b16 %v900, %v899
        %v903 = vsel %vm711, %v901, 0
        %905 = vmatprep.subr.bf16.mxu0 0
        %906 = vmatpush1.bf16.msra.mxu0 0
        %907 = vmatprep.subr.bf16.mxu0 0
        %908 = vmatpush1.bf16.msra.mxu0 0
        %909 = vmatprep.subr.bf16.mxu0 0
        %910 = vmatpush1.bf16.msra.mxu0 0
        %911 = vmatprep.subr.bf16.mxu0 0
        %912 = vmatpush1.bf16.msra.mxu0 0
        %913 = vmatprep.subr.bf16.mxu0 0
        %914 = vmatpush1.bf16.msra.mxu0 0
        %915 = vmatprep.subr.bf16.mxu0 0
        %916 = vmatpush1.bf16.msra.mxu0 0
        %917 = vmatprep.subr.bf16.mxu0 %v572
        %918 = vmatpush1.bf16.msra.mxu0 %v571
        %919 = vmatprep.subr.bf16.mxu0 %v570
        %920 = vmatpush1.bf16.msra.mxu0 %v569
        %921 = vmatprep.subr.bf16.mxu0 0
        %922 = vmatpush2.bf16.msra.mxu0 0
        %923 = vmatprep.subr.bf16.mxu0 0
        %924 = vmatpush2.bf16.msra.mxu0 0
        %925 = vmatprep.subr.bf16.mxu0 0
        %926 = vmatpush2.bf16.msra.mxu0 0
        %927 = vmatprep.subr.bf16.mxu0 0
        %928 = vmatpush2.bf16.msra.mxu0 0
        %929 = vmatprep.subr.bf16.mxu0 0
        %930 = vmatpush2.bf16.msra.mxu0 0
        %931 = vmatprep.subr.bf16.mxu0 0
        %932 = vmatpush2.bf16.msra.mxu0 0
        %933 = vmatprep.subr.bf16.mxu0 0
        %934 = vmatpush2.bf16.msra.mxu0 0
        %935 = vmatprep.subr.bf16.mxu0 0
        %936 = vmatpush2.bf16.msra.mxu0 0
        %937 = vmatprep.mubr.bf16.mxu0 0
        %938 = vmatmul.mubr.bf16.gmra.mxu0 %v903
        %v939 = vpop.f32.mrf.mxu0
        %v940 = vadd.f32 %v890, %v939
        %v941 = vpop.f32.mrf.mxu0
        %v942 = vadd.f32 %v890, %v941
        %v943 = vpop.f32.mrf.mxu0
        %v944 = vadd.f32 %v895, %v943
        %v945 = vpop.f32.mrf.mxu0
        %v946 = vadd.f32 %v895, %v945
        %947 = vdwg.mxu0
        %v948 = vmax.f32 %v940, 0.0
        %v949 = vmax.f32 %v942, 0.0
        %v950 = vmax.f32 %v944, 0.0
        %v951 = vmax.f32 %v946, 0.0
        %v952 = vpack.c.bf16 %v950, %v948
        %v953 = vpack.c.bf16 %v951, %v949
        %v954 = vld [vmem:[#allocation7] sm:$0xf]
        %v955 = vld [vmem:[#allocation7 + $0x4] sm:$0xf]
        %v956 = vld [vmem:[%s5] sm:$0xff]
        %v957 = vld [vmem:[%s5 + $0x8] sm:$0xff]
        %959 = vset.pattern.permute.xlu0 0
        %960 = vperm.xlu0 %959, %v956
        %v961 = vpop.permute.xlu0 %960
        %964 = vset.pattern.permute.xlu0 0
        %965 = vperm.xlu0 %964, %v957
        %v966 = vpop.permute.xlu0 %965
        %v970 = vunpack.c.l.b16 %v954
        %v971 = vunpack.c.l.b16 %v955
        %v972 = vpack.c.b16 %v971, %v970
        %v974 = vsel %vm772, %v972, 0
        %976 = vmatprep.subr.bf16.mxu0 0
        %977 = vmatpush1.bf16.msra.mxu0 0
        %978 = vmatprep.subr.bf16.mxu0 0
        %979 = vmatpush1.bf16.msra.mxu0 0
        %980 = vmatprep.subr.bf16.mxu0 0
        %981 = vmatpush1.bf16.msra.mxu0 0
        %982 = vmatprep.subr.bf16.mxu0 0
        %983 = vmatpush1.bf16.msra.mxu0 0
        %984 = vmatprep.subr.bf16.mxu0 0
        %985 = vmatpush1.bf16.msra.mxu0 0
        %986 = vmatprep.subr.bf16.mxu0 0
        %987 = vmatpush1.bf16.msra.mxu0 0
        %988 = vmatprep.subr.bf16.mxu0 0
        %989 = vmatpush1.bf16.msra.mxu0 0
        %990 = vmatprep.subr.bf16.mxu0 %v953
        %991 = vmatpush1.bf16.msra.mxu0 %v952
        %992 = vmatprep.subr.bf16.mxu0 0
        %993 = vmatpush2.bf16.msra.mxu0 0
        %994 = vmatprep.subr.bf16.mxu0 0
        %995 = vmatpush2.bf16.msra.mxu0 0
        %996 = vmatprep.subr.bf16.mxu0 0
        %997 = vmatpush2.bf16.msra.mxu0 0
        %998 = vmatprep.subr.bf16.mxu0 0
        %999 = vmatpush2.bf16.msra.mxu0 0
        %1000 = vmatprep.subr.bf16.mxu0 0
        %1001 = vmatpush2.bf16.msra.mxu0 0
        %1002 = vmatprep.subr.bf16.mxu0 0
        %1003 = vmatpush2.bf16.msra.mxu0 0
        %1004 = vmatprep.subr.bf16.mxu0 0
        %1005 = vmatpush2.bf16.msra.mxu0 0
        %1006 = vmatprep.subr.bf16.mxu0 0
        %1007 = vmatpush2.bf16.msra.mxu0 0
        %1008 = vmatprep.mubr.bf16.mxu0 0
        %1009 = vmatmul.mubr.bf16.gmra.mxu0 %v974
        %v1010 = vpop.f32.mrf.mxu0
        %v1011 = vadd.f32 %v961, %v1010
        %v1012 = vpop.f32.mrf.mxu0
        %v1013 = vadd.f32 %v961, %v1012
        %v1014 = vpop.f32.mrf.mxu0
        %v1015 = vadd.f32 %v966, %v1014
        %v1016 = vpop.f32.mrf.mxu0
        %v1017 = vadd.f32 %v966, %v1016
        %1018 = vdwg.mxu0
        %v1019 = vmax.f32 %v1011, 0.0
        %v1020 = vmax.f32 %v1013, 0.0
        %v1021 = vmax.f32 %v1015, 0.0
        %v1022 = vmax.f32 %v1017, 0.0
        %v1023 = vpack.c.bf16 %v1021, %v1019
        %v1024 = vpack.c.bf16 %v1022, %v1020
        %v1026 = vsel %vm772, %v817, 0
        %1028 = vmatprep.subr.bf16.mxu0 0
        %1029 = vmatpush1.bf16.msra.mxu0 0
        %1030 = vmatprep.subr.bf16.mxu0 0
        %1031 = vmatpush1.bf16.msra.mxu0 0
        %1032 = vmatprep.subr.bf16.mxu0 0
        %1033 = vmatpush1.bf16.msra.mxu0 0
        %1034 = vmatprep.subr.bf16.mxu0 0
        %1035 = vmatpush1.bf16.msra.mxu0 0
        %1036 = vmatprep.subr.bf16.mxu0 0
        %1037 = vmatpush1.bf16.msra.mxu0 0
        %1038 = vmatprep.subr.bf16.mxu0 0
        %1039 = vmatpush1.bf16.msra.mxu0 0
        %1040 = vmatprep.subr.bf16.mxu0 0
        %1041 = vmatpush1.bf16.msra.mxu0 0
        %1042 = vmatprep.subr.bf16.mxu0 %v1024
        %1043 = vmatpush1.bf16.msra.mxu0 %v1023
        %1044 = vmatprep.subr.bf16.mxu0 0
        %1045 = vmatpush2.bf16.msra.mxu0 0
        %1046 = vmatprep.subr.bf16.mxu0 0
        %1047 = vmatpush2.bf16.msra.mxu0 0
        %1048 = vmatprep.subr.bf16.mxu0 0
        %1049 = vmatpush2.bf16.msra.mxu0 0
        %1050 = vmatprep.subr.bf16.mxu0 0
        %1051 = vmatpush2.bf16.msra.mxu0 0
        %1052 = vmatprep.subr.bf16.mxu0 0
        %1053 = vmatpush2.bf16.msra.mxu0 0
        %1054 = vmatprep.subr.bf16.mxu0 0
        %1055 = vmatpush2.bf16.msra.mxu0 0
        %1056 = vmatprep.subr.bf16.mxu0 0
        %1057 = vmatpush2.bf16.msra.mxu0 0
        %1058 = vmatprep.subr.bf16.mxu0 0
        %1059 = vmatpush2.bf16.msra.mxu0 0
        %1060 = vmatprep.mubr.bf16.mxu0 0
        %1061 = vmatmul.mubr.bf16.gmra.mxu0 %v1026
        %v1062 = vpop.f32.mrf.mxu0
        %v1063 = vadd.f32 0.0, %v1062
        %v1064 = vpop.f32.mrf.mxu0
        %v1065 = vadd.f32 0.0, %v1064
        %v1066 = vpop.f32.mrf.mxu0
        %v1067 = vpop.f32.mrf.mxu0
        %1068 = vdwg.mxu0
        %v1069 = vmul.f32 %v1063, 0.25
        %v1070 = vmul.f32 %v1065, 0.25
        %vm1071 = vcmp.gt.f32.partialorder %v619, 0.0
        %v1072 = vsel %vm1071, 1, 0
        %vm1073 = vcmp.eq.s32.totalorder %v1072, 1
        %v1074 = vsel %vm1073, %v1069, -1e+30
        %v1075 = vsel %vm1073, %v1070, -1e+30
        %v1076 = vrot.slane %v1074, 4
        %v1077 = vmax.f32 %v1074, %v1076
        %v1078 = vrot.slane %v1077, 2
        %v1079 = vmax.f32 %v1077, %v1078
        %v1080 = vrot.slane %v1079, 1
        %v1081 = vmax.f32 %v1079, %v1080
        %v1082 = vrot.slane %v1075, 4
        %v1083 = vmax.f32 %v1075, %v1082
        %v1084 = vrot.slane %v1083, 2
        %v1085 = vmax.f32 %v1083, %v1084
        %v1086 = vrot.slane %v1085, 1
        %v1087 = vmax.f32 %v1085, %v1086
        %v1088 = vsub.f32 %v1069, %v1081
        %v1089 = vsub.f32 %v1070, %v1087
        %v1090 = vmul.f32 %v1088, 1.442695
        %v1091 = vpow.pop %v1090
        %v1092 = vmul.f32 %v1089, 1.442695
        %v1093 = vpow.pop %v1092
        %v1094 = vmul.f32 %v619, %v1091
        %v1095 = vmul.f32 %v619, %v1093
        %v1096 = vrot.slane %v1094, 4
        %v1097 = vadd.f32 %v1094, %v1096
        %v1098 = vrot.slane %v1097, 2
        %v1099 = vadd.f32 %v1097, %v1098
        %v1100 = vrot.slane %v1099, 1
        %v1101 = vadd.f32 %v1099, %v1100
        %v1102 = vrot.slane %v1095, 4
        %v1103 = vadd.f32 %v1095, %v1102
        %v1104 = vrot.slane %v1103, 2
        %v1105 = vadd.f32 %v1103, %v1104
        %v1106 = vrot.slane %v1105, 1
        %v1107 = vadd.f32 %v1105, %v1106
        %v1108 = vmax.f32 %v1101, 1e-30
        %v1109 = vmax.f32 %v1107, 1e-30
        %v1110 = vrcp.pop %v1108
        %v1111 = vrcp.pop %v1109
        %v1112 = vmul.f32 %v1094, %v1110
        %v1113 = vmul.f32 %v1095, %v1111
        %v1114 = vpack.c.bf16 %v1112, %v1112
        %v1115 = vpack.c.bf16 %v1113, %v1113
        %1116 = vxpose.xlu0.c.b16.start [1/8] %v882, 128
        %1117 = vxpose.xlu0.c.b16.cont [2/8] 0, 128
        %1118 = vxpose.xlu0.c.b16.cont [3/8] 0, 128
        %1119 = vxpose.xlu0.c.b16.cont [4/8] 0, 128
        %1120 = vxpose.xlu0.c.b16.cont [5/8] 0, 128
        %1121 = vxpose.xlu0.c.b16.cont [6/8] 0, 128
        %1122 = vxpose.xlu0.c.b16.cont [7/8] 0, 128
        %1123 = vxpose.xlu0.c.b16.end [8/8] 0, 128
        %v1124 = vpop.trf.xlu0
        %v1125 = vpop.trf.xlu0
        %v1126 = vpop.trf.xlu0
        %v1127 = vpop.trf.xlu0
        %v1128 = vpop.trf.xlu0
        %v1129 = vpop.trf.xlu0
        %v1130 = vpop.trf.xlu0
        %v1131 = vpop.trf.xlu0
        %vm1132 = vcmask 64512
        %v1134 = vsel %vm1132, %v1124, 0
        %vm1136 = vcmask 1043456
        %v1138 = vsel %vm1136, %v1114, 0
        %v1141 = vsel %vm1136, %v1115, 0
        %1143 = vmatprep.subr.bf16.mxu0 0
        %1144 = vmatpush1.bf16.msra.mxu0 0
        %1145 = vmatprep.subr.bf16.mxu0 0
        %1146 = vmatpush1.bf16.msra.mxu0 0
        %1147 = vmatprep.subr.bf16.mxu0 0
        %1148 = vmatpush1.bf16.msra.mxu0 0
        %1149 = vmatprep.subr.bf16.mxu0 0
        %1150 = vmatpush1.bf16.msra.mxu0 0
        %1151 = vmatprep.subr.bf16.mxu0 0
        %1152 = vmatpush1.bf16.msra.mxu0 0
        %1153 = vmatprep.subr.bf16.mxu0 0
        %1154 = vmatpush1.bf16.msra.mxu0 0
        %1155 = vmatprep.subr.bf16.mxu0 0
        %1156 = vmatpush1.bf16.msra.mxu0 0
        %1157 = vmatprep.subr.bf16.mxu0 %v1141
        %1158 = vmatpush1.bf16.msra.mxu0 %v1138
        %1159 = vmatprep.subr.bf16.mxu0 0
        %1160 = vmatpush2.bf16.msra.mxu0 0
        %1161 = vmatprep.subr.bf16.mxu0 0
        %1162 = vmatpush2.bf16.msra.mxu0 0
        %1163 = vmatprep.subr.bf16.mxu0 0
        %1164 = vmatpush2.bf16.msra.mxu0 0
        %1165 = vmatprep.subr.bf16.mxu0 0
        %1166 = vmatpush2.bf16.msra.mxu0 0
        %1167 = vmatprep.subr.bf16.mxu0 0
        %1168 = vmatpush2.bf16.msra.mxu0 0
        %1169 = vmatprep.subr.bf16.mxu0 0
        %1170 = vmatpush2.bf16.msra.mxu0 0
        %1171 = vmatprep.subr.bf16.mxu0 0
        %1172 = vmatpush2.bf16.msra.mxu0 0
        %1173 = vmatprep.subr.bf16.mxu0 0
        %1174 = vmatpush2.bf16.msra.mxu0 0
        %1175 = vmatprep.mubr.bf16.mxu0 0
        %1176 = vmatmul.mubr.bf16.gmra.mxu0 %v1134
        %v1177 = vpop.f32.mrf.mxu0
        %v1178 = vadd.f32 0.0, %v1177
        %v1179 = vpop.f32.mrf.mxu0
        %v1180 = vadd.f32 0.0, %v1179
        %v1181 = vpop.f32.mrf.mxu0
        %v1182 = vadd.f32 0.0, %v1181
        %v1183 = vpop.f32.mrf.mxu0
        %v1184 = vadd.f32 0.0, %v1183
        %1185 = vdwg.mxu0
        %v1186 = vpack.c.bf16 %v1182, %v1178
        %v1187 = vpack.c.bf16 %v1184, %v1180
        %v1188 = vld [vmem:[%s12] sm:$0xf]
        %v1189 = vld [vmem:[%s12 + $0x4] sm:$0xf]
        %v1190 = vld [vmem:[%s12 + $0x8] sm:$0xf]
        %v1191 = vld [vmem:[%s12 + $0xc] sm:$0xf]
        %v1192 = vld [vmem:[%s13] sm:$0xff]
        %v1193 = vld [vmem:[%s13 + $0x8] sm:$0xff]
        %v1194 = vld [vmem:[%s13 + $0x10] sm:$0xff]
        %v1195 = vld [vmem:[%s13 + $0x18] sm:$0xff]
        %1197 = vset.pattern.permute.xlu0 0
        %1198 = vperm.xlu0 %1197, %v1192
        %v1199 = vpop.permute.xlu0 %1198
        %1202 = vset.pattern.permute.xlu0 0
        %1203 = vperm.xlu0 %1202, %v1193
        %v1204 = vpop.permute.xlu0 %1203
        %1207 = vset.pattern.permute.xlu0 0
        %1208 = vperm.xlu0 %1207, %v1194
        %v1209 = vpop.permute.xlu0 %1208
        %1212 = vset.pattern.permute.xlu0 0
        %1213 = vperm.xlu0 %1212, %v1195
        %v1214 = vpop.permute.xlu0 %1213
        %v1220 = vunpack.c.l.b16 %v1188
        %v1221 = vunpack.c.l.b16 %v1189
        %v1222 = vunpack.c.l.b16 %v1190
        %v1223 = vunpack.c.l.b16 %v1191
        %v1224 = vpack.c.b16 %v1221, %v1220
        %v1225 = vpack.c.b16 %v1223, %v1222
        %v1227 = vsel %vm772, %v1224, 0
        %v1230 = vsel %vm772, %v1225, 0
        %1232 = vmatprep.subr.bf16.mxu0 0
        %1233 = vmatpush1.bf16.msra.mxu0 0
        %1234 = vmatprep.subr.bf16.mxu0 0
        %1235 = vmatpush1.bf16.msra.mxu0 0
        %1236 = vmatprep.subr.bf16.mxu0 0
        %1237 = vmatpush1.bf16.msra.mxu0 0
        %1238 = vmatprep.subr.bf16.mxu0 0
        %1239 = vmatpush1.bf16.msra.mxu0 0
        %1240 = vmatprep.subr.bf16.mxu0 0
        %1241 = vmatpush1.bf16.msra.mxu0 0
        %1242 = vmatprep.subr.bf16.mxu0 0
        %1243 = vmatpush1.bf16.msra.mxu0 0
        %1244 = vmatprep.subr.bf16.mxu0 0
        %1245 = vmatpush1.bf16.msra.mxu0 0
        %1246 = vmatprep.subr.bf16.mxu0 %v1187
        %1247 = vmatpush1.bf16.msra.mxu0 %v1186
        %1248 = vmatprep.subr.bf16.mxu0 0
        %1249 = vmatpush2.bf16.msra.mxu0 0
        %1250 = vmatprep.subr.bf16.mxu0 0
        %1251 = vmatpush2.bf16.msra.mxu0 0
        %1252 = vmatprep.subr.bf16.mxu0 0
        %1253 = vmatpush2.bf16.msra.mxu0 0
        %1254 = vmatprep.subr.bf16.mxu0 0
        %1255 = vmatpush2.bf16.msra.mxu0 0
        %1256 = vmatprep.subr.bf16.mxu0 0
        %1257 = vmatpush2.bf16.msra.mxu0 0
        %1258 = vmatprep.subr.bf16.mxu0 0
        %1259 = vmatpush2.bf16.msra.mxu0 0
        %1260 = vmatprep.subr.bf16.mxu0 0
        %1261 = vmatpush2.bf16.msra.mxu0 0
        %1262 = vmatprep.subr.bf16.mxu0 0
        %1263 = vmatpush2.bf16.msra.mxu0 0
        %1264 = vmatprep.mubr.bf16.mxu0 0
        %1265 = vmatmul.mubr.bf16.gmra.mxu0 %v1227
        %v1266 = vpop.f32.mrf.mxu0
        %v1267 = vadd.f32 %v1199, %v1266
        %v1268 = vpop.f32.mrf.mxu0
        %v1269 = vadd.f32 %v1199, %v1268
        %v1270 = vpop.f32.mrf.mxu0
        %v1271 = vadd.f32 %v1204, %v1270
        %v1272 = vpop.f32.mrf.mxu0
        %v1273 = vadd.f32 %v1204, %v1272
        %1274 = vmatprep.mubr.bf16.mxu0 0
        %1275 = vmatmul.mubr.bf16.gmra.mxu0 %v1230
        %v1276 = vpop.f32.mrf.mxu0
        %v1277 = vadd.f32 %v1209, %v1276
        %v1278 = vpop.f32.mrf.mxu0
        %v1279 = vadd.f32 %v1209, %v1278
        %v1280 = vpop.f32.mrf.mxu0
        %v1281 = vadd.f32 %v1214, %v1280
        %v1282 = vpop.f32.mrf.mxu0
        %v1283 = vadd.f32 %v1214, %v1282
        %1284 = vdwg.mxu0
        %v1285 = vmax.f32 %v1267, 0.0
        %v1286 = vmax.f32 %v1269, 0.0
        %v1287 = vmax.f32 %v1271, 0.0
        %v1288 = vmax.f32 %v1273, 0.0
        %v1289 = vmax.f32 %v1277, 0.0
        %v1290 = vmax.f32 %v1279, 0.0
        %v1291 = vmax.f32 %v1281, 0.0
        %v1292 = vmax.f32 %v1283, 0.0
        %v1293 = vpack.c.bf16 %v1287, %v1285
        %v1294 = vpack.c.bf16 %v1288, %v1286
        %v1295 = vpack.c.bf16 %v1291, %v1289
        %v1296 = vpack.c.bf16 %v1292, %v1290
        %v1301 = vunpack.c.l.b16 %v1293
        %v1302 = vunpack.c.l.b16 %v1294
        %v1303 = vunpack.c.h.b16 %v1293
        %v1304 = vunpack.c.h.b16 %v1294
        %v1305 = vunpack.c.l.b16 %v1295
        %v1306 = vunpack.c.l.b16 %v1296
        %v1307 = vunpack.c.h.b16 %v1295
        %v1308 = vunpack.c.h.b16 %v1296
        %v1309 = vpack.c.b16 %v1302, %v1301
        %v1310 = vpack.c.b16 %v1304, %v1303
        %v1311 = vpack.c.b16 %v1306, %v1305
        %v1312 = vpack.c.b16 %v1308, %v1307
        %1317 = vst [vmem:[%s554] sm:$0xff] %v1309
        %1318 = vst [vmem:[%s554 + $0x8] sm:$0xff] %v1310
        %1319 = vst [vmem:[%s554 + $0x10] sm:$0xff] %v1311
        %1320 = vst [vmem:[%s554 + $0x18] sm:$0xff] %v1312
        %s1321 = sand.u32 %s345, 1
        %s1322 = scalar_lea.sflag [#allocation4], %s1321
        %s1323 = sand.u32 %s345, 1
        %s1324 = smul.addr %s1323, 32
        %s1325 = scalar_lea.vmem [#allocation11], %s1324
        // Predicated region
        $region97: #{tpu_custom_call.1} parent=75 // pred_check
          %p1326 = pneg %p355
        $region98: #{tpu_custom_call.1} parent=75 // pred_check_branch
          %1328 = sbr.rel (%p1326) target = $region100
        $region99: #{tpu_custom_call.1} parent=75 // pred_region
          %s1330 = ssub.s32 512, 512
          %1331 = vsyncadd %s1322, %s1330
          %s1332 = smul.addr %s33, 8
          %s1333 = smul.addr %s1332, 64
          %s1334 = scalar_lea.hbm %s14, %s1333
          %s1335 = sshll.u32 %s1325, 4
          %s1336 = int_to_ptr.vmem [resolvable:$true] %s1335
          %1341 = dma.vmem_to_hbm [thread:$0]  %s1336, 512, %s1334, %s1322, 128, 128, 8
        $region100: #{tpu_custom_call.1} parent=75 // pred_fallthru
          _
      $region76: #{tpu_custom_call.1} parent=5 // pred_fallthru
        _
      %p1342 = scmp.le.s32.totalorder 2, %s28
      // Predicated region
      $region101: #{tpu_custom_call.1} parent=5 // pred_check
        %p1343 = pneg %p1342
      $region102: #{tpu_custom_call.1} parent=5 // pred_check_branch
        %1345 = sbr.rel (%p1343) target = $region104
      $region103: #{tpu_custom_call.1} parent=5 // pred_region
        %s1346 = ssub.s32 %s28, 2
        // Predicated region
        $region105: #{tpu_custom_call.1} parent=103 // pred_check
          %p1347 = pneg %p361
        $region106: #{tpu_custom_call.1} parent=103 // pred_check_branch
          %1349 = sbr.rel (%p1347) target = $region108
        $region107: #{tpu_custom_call.1} parent=103 // pred_region
          %s1350 = sand.u32 %s346, 1
          %s1351 = scalar_lea.sflag [#allocation4], %s1350
          %s1352 = sand.u32 %s346, 1
          %s1353 = smul.addr %s1352, 32
          %s1354 = scalar_lea.vmem [#allocation11], %s1353
          %1355 = dma.done %s1351, 512
        $region108: #{tpu_custom_call.1} parent=103 // pred_fallthru
          _
      $region104: #{tpu_custom_call.1} parent=5 // pred_fallthru
        _
    $region6: #{tpu_custom_call.1} parent=1 // loop_footer
      %s32 = sadd.s32 1, %s28
    $region7: #{tpu_custom_call.1} parent=1 // loop_footer_branch
      %27 = sbr.rel target = $region3
    $region8: #{tpu_custom_call.1} parent=1 // loop_exit
      _
    %1356 = vsyncpa [#allocation3], 1
    %s1357 = scalar_lea.sflag [#allocation3], 1
    %1358 = vsyncpa %s1357, 1
    %1359 = vsyncpa [#allocation6], 1
    %1360 = vsyncpa [#allocation9], 1
    %1361 = vsyncpa [#allocation4], 1
    %s1362 = scalar_lea.sflag [#allocation4], 1
    %1363 = vsyncpa %s1362, 1

</llo_original>
